<compile_context>
chip_gen: v6e
topology: v6e:2x2x1
jax: 0.10.0
libtpu: 0.0.40
codegen_flags: <defaults>
</compile_context>

<pallas_src>
import functools

import jax
import jax.numpy as jnp
from jax.experimental import pallas as pl
from jax.experimental.pallas import tpu as pltpu


def _conv_tap_kernel(x_ref, w_ref, b_ref, o_ref, *, KH, KW, W_pad, stride, L):
    """One batch image.

    x_ref : (Cin, Lx)           flattened, zero-padded input image
    w_ref : (KH*KW, Cout, Cin)  per-tap weight matrices (grid-invariant)
    b_ref : (Cout, 1)           bias column (grid-invariant)
    o_ref : (Cout, L)           L = OH * W_pad (junk cols sliced off outside)
    """
    # Start the f32 accumulator from the broadcast bias (hoisted out of the
    # tap loop), then add one small MXU matmul per kernel tap.
    acc = jnp.zeros(o_ref.shape, jnp.float32) + b_ref[...].astype(jnp.float32)
    for kh in range(KH):
        for kw in range(KW):
            off = kh * W_pad + kw                      # static tap offset
            if stride == 1:
                xs = x_ref[:, pl.ds(off, L)]           # (Cin, L), static slice
            else:
                xs = x_ref[:, pl.ds(off, L, stride)]   # strided tap slice
            acc = acc + jnp.dot(w_ref[kh * KW + kw], xs,
                                preferred_element_type=jnp.float32)
    o_ref[...] = acc.astype(o_ref.dtype)


@functools.partial(jax.jit, static_argnames=("stride", "padding"))
def conv_bias_forward(x_nchw, weight, bias, *, stride, padding):
    """
    x_nchw : [N, Cin, H, W]   (PyTorch layout)
    weight : [Cout, Cin, KH, KW]
    bias   : [Cout]
    returns: [N, Cout, OH, OW]
    """
    N, Cin, H, W = x_nchw.shape
    Cout, _, KH, KW = weight.shape
    OH = (H + 2 * padding - KH) // stride + 1
    OW = (W + 2 * padding - KW) // stride + 1
    H_pad, W_pad = H + 2 * padding, W + 2 * padding

    # Zero-pad spatial dims, staying in native NCHW (no layout transpose).
    x = jnp.pad(x_nchw, ((0, 0), (0, 0), (padding, padding), (padding, padding)))

    # Flatten spatial dims; pad the flat axis so every tap slice stays
    # in-bounds (extra reads only feed junk columns sliced off below), and
    # round it up to a lane multiple so the per-image input slab is aligned.
    L = OH * W_pad
    Lx_needed = stride * (L - 1) + (KH - 1) * W_pad + (KW - 1) + 1
    Lx = max(Lx_needed, H_pad * W_pad)
    Lx = ((Lx + 127) // 128) * 128
    x_flat = x.reshape(N, Cin, H_pad * W_pad)
    if Lx > H_pad * W_pad:
        x_flat = jnp.pad(x_flat, ((0, 0), (0, 0), (0, Lx - H_pad * W_pad)))

    # Per-tap weight matrices, (KH*KW, Cout, Cin); bias as a column.
    w_taps = jnp.transpose(weight, (2, 3, 0, 1)).reshape(KH * KW, Cout, Cin)
    b_col = bias.reshape(Cout, 1)

    kernel = functools.partial(_conv_tap_kernel, KH=KH, KW=KW, W_pad=W_pad,
                               stride=stride, L=L)

    itemsize = x_flat.dtype.itemsize
    # Double-buffered input/output blocks + resident weight/bias blocks.
    est_vmem = itemsize * (2 * Cin * Lx + 2 * Cout * L
                           + 2 * KH * KW * Cout * Cin + 2 * Cout) + (1 << 20)
    vmem_limit = None
    if est_vmem > 12 * 1024 * 1024:           # only bump when actually needed
        vmem_limit = min(int(est_vmem), 64 * 1024 * 1024)   # v7x-safe ceiling

    cost = pl.CostEstimate(
        flops=2 * N * OH * OW * Cout * Cin * KH * KW,
        transcendentals=0,
        bytes_accessed=itemsize * (N * Cin * Lx + KH * KW * Cout * Cin + Cout
                                   + N * Cout * L),
    )

    out = pl.pallas_call(
        kernel,
        out_shape=jax.ShapeDtypeStruct((N, Cout, L), x_nchw.dtype),
        grid_spec=pltpu.PrefetchScalarGridSpec(
            num_scalar_prefetch=0,
            grid=(N,),
            in_specs=[
                pl.BlockSpec((None, Cin, Lx), lambda n: (n, 0, 0)),
                pl.BlockSpec((KH * KW, Cout, Cin), lambda n: (0, 0, 0)),
                pl.BlockSpec((Cout, 1), lambda n: (0, 0)),
            ],
            out_specs=pl.BlockSpec((None, Cout, L), lambda n: (n, 0, 0)),
        ),
        compiler_params=pltpu.CompilerParams(
            dimension_semantics=("parallel",),
            vmem_limit_bytes=vmem_limit),
        cost_estimate=cost,
    )(x_flat, w_taps, b_col)

    # (N, Cout, OH*W_pad) is already NCHW order; drop the junk columns that the
    # padded-width flattening produced.
    out = out.reshape(N, Cout, OH, W_pad)
    return out[:, :, :, :OW]


if __name__ == "__main__":
    # Module config: conv_bias(inp=4, oup=8, kernel=3, stride=1, padding=1)
    inp, oup, kernel_size, stride, padding = 4, 8, 3, 1, 1
    N, H, W = 2, 16, 16

    key = jax.random.PRNGKey(0)
    kx, kwt, kb = jax.random.split(key, 3)

    x = jax.random.normal(kx, (N, inp, H, W), dtype=jnp.float32)
    fan_in = inp * kernel_size * kernel_size
    bound = 1.0 / (fan_in ** 0.5)
    weight = jax.random.uniform(kwt, (oup, inp, kernel_size, kernel_size),
                                minval=-bound, maxval=bound, dtype=jnp.float32)
    bias = jax.random.uniform(kb, (oup,), minval=-bound, maxval=bound,
                              dtype=jnp.float32)

    y = conv_bias_forward(x, weight, bias, stride=stride, padding=padding)
    y = jax.block_until_ready(y)

    # Reference check against XLA's conv (sanity only).
    y_ref = jax.lax.conv_general_dilated(
        x, weight, window_strides=(stride, stride),
        padding=[(padding, padding), (padding, padding)],
        dimension_numbers=("NCHW", "OIHW", "NCHW")) + bias[None, :, None, None]

    assert y.shape == (N, oup, H, W)
    assert jnp.allclose(y, y_ref, atol=1e-4, rtol=1e-4)
    print("KERNEL_OK")
</pallas_src>

<mosaic_0001>
module attributes {stable_mosaic.version = 11 : i64} {
  func.func @_conv_tap_kernel(%arg0: i32, %arg1: memref<1x4x384xf32, #tpu.memory_space<vmem>>, %arg2: memref<9x8x4xf32, #tpu.memory_space<vmem>>, %arg3: memref<8x1xf32, #tpu.memory_space<vmem>>, %arg4: memref<1x8x288xf32, #tpu.memory_space<vmem>>) attributes {dimension_semantics = [#tpu.dimension_semantics<parallel>], iteration_bounds = array<i64: 2>, scalar_prefetch = 0 : i64, scratch_operands = 0 : i64, tpu.core_type = #tpu.core_type<tc>, window_params = [{transform_indices = @transform_0, window_bounds = array<i64: 1, 4, 384>}, {pipeline_mode = #tpu.pipeline_mode<synchronous>, transform_indices = @transform_1, window_bounds = array<i64: 9, 8, 4>}, {pipeline_mode = #tpu.pipeline_mode<synchronous>, transform_indices = @transform_2, window_bounds = array<i64: 8, 1>}, {transform_indices = @transform_3, window_bounds = array<i64: 1, 8, 288>}]} {
    %cst = arith.constant 0.000000e+00 : f32
    %0 = vector.broadcast %cst : f32 to vector<8x288xf32>
    %c0 = arith.constant 0 : index
    %c0_0 = arith.constant 0 : index
    %1 = vector.load %arg3[%c0, %c0_0] : memref<8x1xf32, #tpu.memory_space<vmem>>, vector<8x1xf32>
    %2 = vector.broadcast %1 : vector<8x1xf32> to vector<8x288xf32>
    %3 = arith.addf %0, %2 : vector<8x288xf32>
    %c0_1 = arith.constant 0 : index
    %c0_2 = arith.constant 0 : index
    %c0_3 = arith.constant 0 : index
    %4 = vector.load %arg1[%c0_1, %c0_2, %c0_3] : memref<1x4x384xf32, #tpu.memory_space<vmem>>, vector<1x4x288xf32>
    %5 = vector.shape_cast %4 : vector<1x4x288xf32> to vector<4x288xf32>
    %c0_4 = arith.constant 0 : index
    %c0_5 = arith.constant 0 : index
    %c0_6 = arith.constant 0 : index
    %6 = vector.load %arg2[%c0_4, %c0_5, %c0_6] : memref<9x8x4xf32, #tpu.memory_space<vmem>>, vector<1x8x4xf32>
    %7 = vector.shape_cast %6 : vector<1x8x4xf32> to vector<8x4xf32>
    %cst_7 = arith.constant dense<0.000000e+00> : vector<8x288xf32>
    %8 = tpu.matmul %7, %5, %cst_7 {dimension_numbers = #tpu.dot_dimension_numbers<[1], [0], [0], [1], [0, 0, 1, 1], [], []>} : vector<8x4xf32>, vector<4x288xf32>, vector<8x288xf32> -> vector<8x288xf32>
    %9 = arith.addf %3, %8 : vector<8x288xf32>
    %c0_8 = arith.constant 0 : index
    %c0_9 = arith.constant 0 : index
    %c1 = arith.constant 1 : index
    %10 = vector.load %arg1[%c0_8, %c0_9, %c1] : memref<1x4x384xf32, #tpu.memory_space<vmem>>, vector<1x4x288xf32>
    %11 = vector.shape_cast %10 : vector<1x4x288xf32> to vector<4x288xf32>
    %c1_10 = arith.constant 1 : index
    %c0_11 = arith.constant 0 : index
    %c0_12 = arith.constant 0 : index
    %12 = vector.load %arg2[%c1_10, %c0_11, %c0_12] : memref<9x8x4xf32, #tpu.memory_space<vmem>>, vector<1x8x4xf32>
    %13 = vector.shape_cast %12 : vector<1x8x4xf32> to vector<8x4xf32>
    %cst_13 = arith.constant dense<0.000000e+00> : vector<8x288xf32>
    %14 = tpu.matmul %13, %11, %cst_13 {dimension_numbers = #tpu.dot_dimension_numbers<[1], [0], [0], [1], [0, 0, 1, 1], [], []>} : vector<8x4xf32>, vector<4x288xf32>, vector<8x288xf32> -> vector<8x288xf32>
    %15 = arith.addf %9, %14 : vector<8x288xf32>
    %c0_14 = arith.constant 0 : index
    %c0_15 = arith.constant 0 : index
    %c2 = arith.constant 2 : index
    %16 = vector.load %arg1[%c0_14, %c0_15, %c2] : memref<1x4x384xf32, #tpu.memory_space<vmem>>, vector<1x4x288xf32>
    %17 = vector.shape_cast %16 : vector<1x4x288xf32> to vector<4x288xf32>
    %c2_16 = arith.constant 2 : index
    %c0_17 = arith.constant 0 : index
    %c0_18 = arith.constant 0 : index
    %18 = vector.load %arg2[%c2_16, %c0_17, %c0_18] : memref<9x8x4xf32, #tpu.memory_space<vmem>>, vector<1x8x4xf32>
    %19 = vector.shape_cast %18 : vector<1x8x4xf32> to vector<8x4xf32>
    %cst_19 = arith.constant dense<0.000000e+00> : vector<8x288xf32>
    %20 = tpu.matmul %19, %17, %cst_19 {dimension_numbers = #tpu.dot_dimension_numbers<[1], [0], [0], [1], [0, 0, 1, 1], [], []>} : vector<8x4xf32>, vector<4x288xf32>, vector<8x288xf32> -> vector<8x288xf32>
    %21 = arith.addf %15, %20 : vector<8x288xf32>
    %c0_20 = arith.constant 0 : index
    %c0_21 = arith.constant 0 : index
    %c18 = arith.constant 18 : index
    %22 = vector.load %arg1[%c0_20, %c0_21, %c18] : memref<1x4x384xf32, #tpu.memory_space<vmem>>, vector<1x4x288xf32>
    %23 = vector.shape_cast %22 : vector<1x4x288xf32> to vector<4x288xf32>
    %c3 = arith.constant 3 : index
    %c0_22 = arith.constant 0 : index
    %c0_23 = arith.constant 0 : index
    %24 = vector.load %arg2[%c3, %c0_22, %c0_23] : memref<9x8x4xf32, #tpu.memory_space<vmem>>, vector<1x8x4xf32>
    %25 = vector.shape_cast %24 : vector<1x8x4xf32> to vector<8x4xf32>
    %cst_24 = arith.constant dense<0.000000e+00> : vector<8x288xf32>
    %26 = tpu.matmul %25, %23, %cst_24 {dimension_numbers = #tpu.dot_dimension_numbers<[1], [0], [0], [1], [0, 0, 1, 1], [], []>} : vector<8x4xf32>, vector<4x288xf32>, vector<8x288xf32> -> vector<8x288xf32>
    %27 = arith.addf %21, %26 : vector<8x288xf32>
    %c0_25 = arith.constant 0 : index
    %c0_26 = arith.constant 0 : index
    %c19 = arith.constant 19 : index
    %28 = vector.load %arg1[%c0_25, %c0_26, %c19] : memref<1x4x384xf32, #tpu.memory_space<vmem>>, vector<1x4x288xf32>
    %29 = vector.shape_cast %28 : vector<1x4x288xf32> to vector<4x288xf32>
    %c4 = arith.constant 4 : index
    %c0_27 = arith.constant 0 : index
    %c0_28 = arith.constant 0 : index
    %30 = vector.load %arg2[%c4, %c0_27, %c0_28] : memref<9x8x4xf32, #tpu.memory_space<vmem>>, vector<1x8x4xf32>
    %31 = vector.shape_cast %30 : vector<1x8x4xf32> to vector<8x4xf32>
    %cst_29 = arith.constant dense<0.000000e+00> : vector<8x288xf32>
    %32 = tpu.matmul %31, %29, %cst_29 {dimension_numbers = #tpu.dot_dimension_numbers<[1], [0], [0], [1], [0, 0, 1, 1], [], []>} : vector<8x4xf32>, vector<4x288xf32>, vector<8x288xf32> -> vector<8x288xf32>
    %33 = arith.addf %27, %32 : vector<8x288xf32>
    %c0_30 = arith.constant 0 : index
    %c0_31 = arith.constant 0 : index
    %c20 = arith.constant 20 : index
    %34 = vector.load %arg1[%c0_30, %c0_31, %c20] : memref<1x4x384xf32, #tpu.memory_space<vmem>>, vector<1x4x288xf32>
    %35 = vector.shape_cast %34 : vector<1x4x288xf32> to vector<4x288xf32>
    %c5 = arith.constant 5 : index
    %c0_32 = arith.constant 0 : index
    %c0_33 = arith.constant 0 : index
    %36 = vector.load %arg2[%c5, %c0_32, %c0_33] : memref<9x8x4xf32, #tpu.memory_space<vmem>>, vector<1x8x4xf32>
    %37 = vector.shape_cast %36 : vector<1x8x4xf32> to vector<8x4xf32>
    %cst_34 = arith.constant dense<0.000000e+00> : vector<8x288xf32>
    %38 = tpu.matmul %37, %35, %cst_34 {dimension_numbers = #tpu.dot_dimension_numbers<[1], [0], [0], [1], [0, 0, 1, 1], [], []>} : vector<8x4xf32>, vector<4x288xf32>, vector<8x288xf32> -> vector<8x288xf32>
    %39 = arith.addf %33, %38 : vector<8x288xf32>
    %c0_35 = arith.constant 0 : index
    %c0_36 = arith.constant 0 : index
    %c36 = arith.constant 36 : index
    %40 = vector.load %arg1[%c0_35, %c0_36, %c36] : memref<1x4x384xf32, #tpu.memory_space<vmem>>, vector<1x4x288xf32>
    %41 = vector.shape_cast %40 : vector<1x4x288xf32> to vector<4x288xf32>
    %c6 = arith.constant 6 : index
    %c0_37 = arith.constant 0 : index
    %c0_38 = arith.constant 0 : index
    %42 = vector.load %arg2[%c6, %c0_37, %c0_38] : memref<9x8x4xf32, #tpu.memory_space<vmem>>, vector<1x8x4xf32>
    %43 = vector.shape_cast %42 : vector<1x8x4xf32> to vector<8x4xf32>
    %cst_39 = arith.constant dense<0.000000e+00> : vector<8x288xf32>
    %44 = tpu.matmul %43, %41, %cst_39 {dimension_numbers = #tpu.dot_dimension_numbers<[1], [0], [0], [1], [0, 0, 1, 1], [], []>} : vector<8x4xf32>, vector<4x288xf32>, vector<8x288xf32> -> vector<8x288xf32>
    %45 = arith.addf %39, %44 : vector<8x288xf32>
    %c0_40 = arith.constant 0 : index
    %c0_41 = arith.constant 0 : index
    %c37 = arith.constant 37 : index
    %46 = vector.load %arg1[%c0_40, %c0_41, %c37] : memref<1x4x384xf32, #tpu.memory_space<vmem>>, vector<1x4x288xf32>
    %47 = vector.shape_cast %46 : vector<1x4x288xf32> to vector<4x288xf32>
    %c7 = arith.constant 7 : index
    %c0_42 = arith.constant 0 : index
    %c0_43 = arith.constant 0 : index
    %48 = vector.load %arg2[%c7, %c0_42, %c0_43] : memref<9x8x4xf32, #tpu.memory_space<vmem>>, vector<1x8x4xf32>
    %49 = vector.shape_cast %48 : vector<1x8x4xf32> to vector<8x4xf32>
    %cst_44 = arith.constant dense<0.000000e+00> : vector<8x288xf32>
    %50 = tpu.matmul %49, %47, %cst_44 {dimension_numbers = #tpu.dot_dimension_numbers<[1], [0], [0], [1], [0, 0, 1, 1], [], []>} : vector<8x4xf32>, vector<4x288xf32>, vector<8x288xf32> -> vector<8x288xf32>
    %51 = arith.addf %45, %50 : vector<8x288xf32>
    %c0_45 = arith.constant 0 : index
    %c0_46 = arith.constant 0 : index
    %c38 = arith.constant 38 : index
    %52 = vector.load %arg1[%c0_45, %c0_46, %c38] : memref<1x4x384xf32, #tpu.memory_space<vmem>>, vector<1x4x288xf32>
    %53 = vector.shape_cast %52 : vector<1x4x288xf32> to vector<4x288xf32>
    %c8 = arith.constant 8 : index
    %c0_47 = arith.constant 0 : index
    %c0_48 = arith.constant 0 : index
    %54 = vector.load %arg2[%c8, %c0_47, %c0_48] : memref<9x8x4xf32, #tpu.memory_space<vmem>>, vector<1x8x4xf32>
    %55 = vector.shape_cast %54 : vector<1x8x4xf32> to vector<8x4xf32>
    %cst_49 = arith.constant dense<0.000000e+00> : vector<8x288xf32>
    %56 = tpu.matmul %55, %53, %cst_49 {dimension_numbers = #tpu.dot_dimension_numbers<[1], [0], [0], [1], [0, 0, 1, 1], [], []>} : vector<8x4xf32>, vector<4x288xf32>, vector<8x288xf32> -> vector<8x288xf32>
    %57 = arith.addf %51, %56 : vector<8x288xf32>
    %c0_50 = arith.constant 0 : index
    %c0_51 = arith.constant 0 : index
    %c0_52 = arith.constant 0 : index
    %58 = vector.load %arg4[%c0_50, %c0_51, %c0_52] : memref<1x8x288xf32, #tpu.memory_space<vmem>>, vector<1x8x288xf32>
    %59 = vector.shape_cast %58 : vector<1x8x288xf32> to vector<8x288xf32>
    %60 = vector.shape_cast %57 : vector<8x288xf32> to vector<1x8x288xf32>
    tpu.vector_store %arg4[%c0_50, %c0_51, %c0_52], %60 {strides = array<i32>} : memref<1x8x288xf32, #tpu.memory_space<vmem>>, vector<1x8x288xf32>,
    return
  }
  func.func @transform_0(%arg0: i32) -> (i32, i32, i32) {
    %c0_i32 = arith.constant 0 : i32
    %c0_i32_0 = arith.constant 0 : i32
    %c0_i32_1 = arith.constant 0 : i32
    return %arg0, %c0_i32, %c0_i32_0 : i32, i32, i32
  }
  func.func @transform_1(%arg0: i32) -> (i32, i32, i32) {
    %c0_i32 = arith.constant 0 : i32
    %c0_i32_0 = arith.constant 0 : i32
    %c0_i32_1 = arith.constant 0 : i32
    %c0_i32_2 = arith.constant 0 : i32
    return %c0_i32, %c0_i32_0, %c0_i32_1 : i32, i32, i32
  }
  func.func @transform_2(%arg0: i32) -> (i32, i32) {
    %c0_i32 = arith.constant 0 : i32
    %c0_i32_0 = arith.constant 0 : i32
    %c0_i32_1 = arith.constant 0 : i32
    return %c0_i32, %c0_i32_0 : i32, i32
  }
  func.func @transform_3(%arg0: i32) -> (i32, i32, i32) {
    %c0_i32 = arith.constant 0 : i32
    %c0_i32_0 = arith.constant 0 : i32
    %c0_i32_1 = arith.constant 0 : i32
    return %arg0, %c0_i32, %c0_i32_0 : i32, i32, i32
  }
}

</mosaic_0001>

<llo_original>
// kernel: conv_bias_forward.1
$region0: #{conv_bias_forward.1}
  #allocation0 [shape = 'u32[]', space=smem, size = 0x4, offset = 0x4, fixed_abs, tag = 'smem constant byte address 0x4 - core index']
  #allocation1 [shape = 'u32[144,128]{1,0:T(1,128)}', space=vmem, size = 0x12000, scoped, tag = 'internal scratch']
  %s0 = inlined_call_operand.vmem [shape: f32[2,4,384], index: 0, kind: input, shape index: {}]
  %s1 = inlined_call_operand.vmem [shape: f32[9,8,4], index: 1, kind: input, shape index: {}]
  %s2 = inlined_call_operand.vmem [shape: f32[8,1], index: 2, kind: input, shape index: {}]
  %s3 = inlined_call_operand.vmem [shape: f32[2,8,288], index: 3, kind: output, shape index: {}]
  %s4 = sld [smem:[#allocation0]]
  $region45: #{conv_bias_forward.1} parent=0
    _
  %s6 = ssub.s32 1, %s4
  %s7 = scalar_select 0, %s6, %s4
  loop: start=0, step=1, limit=4
  $region2: #{conv_bias_forward.1} parent=0 // loop_pre_header
    _
  $region3: #{conv_bias_forward.1} parent=0 // loop_header
    %s9 = sphi 0, %s13
    %p10 = scmp.ge.s32.totalorder %s9, 4
    %s19 = sphi 0, %s21
    %s22 = sphi 0, %s19
    %s23 = sphi 0, %s22
    %s39 = sphi 0, %s23
    %s43 = sphi 0, %s43
    %s45 = sphi 0, %s43
    %s46 = sphi 0, %s45
    %s60 = sphi 0, %s46
    %s64 = sphi 0, %s64
    %s66 = sphi 0, %s64
    %s67 = sphi 0, %s66
    %s81 = sphi 0, %s67
    %s87 = sphi 0, %s89
    %s90 = sphi 0, %s87
    %s91 = sphi 0, %s90
    %s107 = sphi 0, %s91
  $region4: #{conv_bias_forward.1} parent=0 // loop_header_branch
    %12 = sbr.rel (%p10) target = $region8
  $region5: #{conv_bias_forward.1} parent=0 // loop_body
    %s14 = ssub.s32 %s9, 1
    %s15 = ssub.s32 %s9, 2
    %s16 = sadd.s32 %s9, 1
    %s17 = ssub.s32 %s9, %s16
    %p18 = scmp.eq.s32.totalorder %s17, 0
    %s20 = sadd.s32 %s19, 1
    %s21 = scalar_select %p18, %s19, %s20
    %p24 = pneg %p18
    %p25 = scmp.eq.s32.totalorder %s9, 1
    %p26 = por %p24, %p25
    %p27 = scmp.ne.s32.totalorder %s19, %s22
    %p28 = scmp.eq.s32.totalorder %s9, 0
    %p29 = por %p27, %p28
    %p30 = scmp.ne.s32.totalorder %s19, %s22
    %p31 = scmp.eq.s32.totalorder %s14, 1
    %p32 = por %p30, %p31
    %p33 = scmp.ne.s32.totalorder %s22, %s23
    %p34 = scmp.eq.s32.totalorder %s14, 0
    %p35 = por %p33, %p34
    %p36 = scmp.ne.s32.totalorder %s22, %s23
    %p37 = scmp.eq.s32.totalorder %s15, 1
    %p38 = por %p36, %p37
    %p40 = scmp.ne.s32.totalorder %s23, %s39
    %p41 = scmp.eq.s32.totalorder %s15, 0
    %p42 = por %p40, %p41
    %s44 = sadd.s32 %s43, 1
    %p47 = scmp.eq.s32.totalorder %s9, 1
    %p48 = scmp.ne.s32.totalorder %s43, %s45
    %p49 = scmp.eq.s32.totalorder %s9, 0
    %p50 = por %p48, %p49
    %p51 = scmp.ne.s32.totalorder %s43, %s45
    %p52 = scmp.eq.s32.totalorder %s14, 1
    %p53 = por %p51, %p52
    %p54 = scmp.ne.s32.totalorder %s45, %s46
    %p55 = scmp.eq.s32.totalorder %s14, 0
    %p56 = por %p54, %p55
    %p57 = scmp.ne.s32.totalorder %s45, %s46
    %p58 = scmp.eq.s32.totalorder %s15, 1
    %p59 = por %p57, %p58
    %p61 = scmp.ne.s32.totalorder %s46, %s60
    %p62 = scmp.eq.s32.totalorder %s15, 0
    %p63 = por %p61, %p62
    %s65 = sadd.s32 %s64, 1
    %p68 = scmp.eq.s32.totalorder %s9, 1
    %p69 = scmp.ne.s32.totalorder %s64, %s66
    %p70 = scmp.eq.s32.totalorder %s9, 0
    %p71 = por %p69, %p70
    %p72 = scmp.ne.s32.totalorder %s64, %s66
    %p73 = scmp.eq.s32.totalorder %s14, 1
    %p74 = por %p72, %p73
    %p75 = scmp.ne.s32.totalorder %s66, %s67
    %p76 = scmp.eq.s32.totalorder %s14, 0
    %p77 = por %p75, %p76
    %p78 = scmp.ne.s32.totalorder %s66, %s67
    %p79 = scmp.eq.s32.totalorder %s15, 1
    %p80 = por %p78, %p79
    %p82 = scmp.ne.s32.totalorder %s67, %s81
    %p83 = scmp.eq.s32.totalorder %s15, 0
    %p84 = por %p82, %p83
    %s85 = ssub.s32 %s9, %s16
    %p86 = scmp.eq.s32.totalorder %s85, 0
    %s88 = sadd.s32 %s87, 1
    %s89 = scalar_select %p86, %s87, %s88
    %p92 = pneg %p86
    %p93 = scmp.eq.s32.totalorder %s9, 1
    %p94 = por %p92, %p93
    %p95 = scmp.ne.s32.totalorder %s87, %s90
    %p96 = scmp.eq.s32.totalorder %s9, 0
    %p97 = por %p95, %p96
    %p98 = scmp.ne.s32.totalorder %s87, %s90
    %p99 = scmp.eq.s32.totalorder %s14, 1
    %p100 = por %p98, %p99
    %p101 = scmp.ne.s32.totalorder %s90, %s91
    %p102 = scmp.eq.s32.totalorder %s14, 0
    %p103 = por %p101, %p102
    %p104 = scmp.ne.s32.totalorder %s90, %s91
    %p105 = scmp.eq.s32.totalorder %s15, 1
    %p106 = por %p104, %p105
    %p108 = scmp.ne.s32.totalorder %s91, %s107
    %p109 = scmp.eq.s32.totalorder %s15, 0
    %p110 = por %p108, %p109
    %p111 = scmp.le.s32.totalorder 1, %s9
    %p112 = scmp.lt.s32.totalorder %s9, 3
    %p113 = pnand %p111, %p112
    %p114 = pneg %p113
    // Predicated region
    $region9: #{conv_bias_forward.1} parent=5 // pred_check
      _
    $region10: #{conv_bias_forward.1} parent=5 // pred_check_branch
      %116 = sbr.rel (%p113) target = $region12
    $region11: #{conv_bias_forward.1} parent=5 // pred_region
      %s117 = ssub.s32 %s9, 1
      // Predicated region
      $region13: #{conv_bias_forward.1} parent=11 // pred_check
        %p118 = pneg %p56
      $region14: #{conv_bias_forward.1} parent=11 // pred_check_branch
        %120 = sbr.rel (%p118) target = $region16
      $region15: #{conv_bias_forward.1} parent=11 // pred_region
        _
      $region16: #{conv_bias_forward.1} parent=11 // pred_fallthru
        _
      // Predicated region
      $region17: #{conv_bias_forward.1} parent=11 // pred_check
        %p121 = pneg %p77
      $region18: #{conv_bias_forward.1} parent=11 // pred_check_branch
        %123 = sbr.rel (%p121) target = $region20
      $region19: #{conv_bias_forward.1} parent=11 // pred_region
        _
      $region20: #{conv_bias_forward.1} parent=11 // pred_fallthru
        _
    $region12: #{conv_bias_forward.1} parent=5 // pred_fallthru
      _
    %p124 = scmp.lt.s32.totalorder %s9, 2
    // Predicated region
    $region21: #{conv_bias_forward.1} parent=5 // pred_check
      %p125 = pneg %p124
    $region22: #{conv_bias_forward.1} parent=5 // pred_check_branch
      %127 = sbr.rel (%p125) target = $region24
    $region23: #{conv_bias_forward.1} parent=5 // pred_region
      // Predicated region
      $region25: #{conv_bias_forward.1} parent=23 // pred_check
        %p128 = pneg %p29
      $region26: #{conv_bias_forward.1} parent=23 // pred_check_branch
        %130 = sbr.rel (%p128) target = $region28
      $region27: #{conv_bias_forward.1} parent=23 // pred_region
        %p131 = scmp.lt.s32.totalorder %s9, 1
        %s132 = scalar_select %p131, %s9, 1
        %s133 = smul.addr %s132, 3
        %s134 = smul.addr %s133, 4
        %s135 = scalar_lea.vmem %s0, %s134
      $region28: #{conv_bias_forward.1} parent=23 // pred_fallthru
        _
    $region24: #{conv_bias_forward.1} parent=5 // pred_fallthru
      _
    %p136 = scmp.le.s32.totalorder 1, %s9
    %p137 = scmp.lt.s32.totalorder %s9, 3
    %p138 = pnand %p136, %p137
    %p139 = pneg %p138
    // Predicated region
    $region29: #{conv_bias_forward.1} parent=5 // pred_check
      _
    $region30: #{conv_bias_forward.1} parent=5 // pred_check_branch
      %141 = sbr.rel (%p138) target = $region32
    $region31: #{conv_bias_forward.1} parent=5 // pred_region
      %s142 = ssub.s32 %s9, 1
      %p143 = scmp.lt.s32.totalorder %s14, 1
      %s144 = scalar_select %p143, %s14, 1
      %s145 = smul.addr %s144, 3
      %s146 = smul.addr %s145, 4
      %s147 = scalar_lea.vmem %s0, %s146
      %p148 = pneg %p35
      %p149 = pneg %p32
      %p150 = pneg %p56
      %p151 = pneg %p53
      %p152 = pneg %p77
      %p153 = pneg %p74
      %p154 = pneg %p103
      %p155 = pneg %p100
      %p156 = scmp.lt.s32.totalorder %s14, 1
      %s157 = scalar_select %p156, %s14, 1
      %s158 = smul.addr %s157, 3
      %s159 = smul.addr %s158, 8
      %s160 = scalar_lea.vmem %s3, %s159
      %p161 = scmp.lt.s32.totalorder %s14, 1
      %s162 = scalar_select %p161, %s14, 1
      %s163 = smul.addr %s162, 3
      %s164 = smul.addr %s163, 4
      %s165 = scalar_lea.vmem %s0, %s164
      %p166 = scmp.lt.s32.totalorder %s14, 1
      %s167 = scalar_select %p166, %s14, 1
      %s168 = smul.addr %s167, 3
      %s169 = smul.addr %s168, 8
      %s170 = scalar_lea.vmem %s3, %s169
      %v171 = vld [vmem:[%s2] sm:$0xff]
      %173 = vset.pattern.permute.xlu0 0
      %174 = vperm.xlu0 %173, %v171
      %v175 = vpop.permute.xlu0 %174
      %v177 = vadd.f32 %v175, 0.0
      %v178 = vld [vmem:[%s165] sm:$0xff]
      %v179 = vld [vmem:[%s165 + $0x8] sm:$0xf]
      %v180 = vld [vmem:[%s1] sm:$0xff]
      %v183 = vcombine.high %v178, %v178
      %vm184 = vcmask 31744
      %v186 = vsel %vm184, %v180, 0
      %vm188 = vcmask 1043456
      %v189 = vsel %vm188, %v178, 0
      %v191 = vsel %vm188, %v183, 0
      %v193 = vsel %vm188, %v179, 0
      %195 = vmatprep.subr.mxu0 0.0
      %196 = vmatpush1.msra.mxu0 0.0
      %197 = vmatprep.subr.mxu0 0.0
      %198 = vmatpush1.msra.mxu0 0.0
      %199 = vmatprep.subr.mxu0 0.0
      %200 = vmatpush1.msra.mxu0 0.0
      %201 = vmatprep.subr.mxu0 0.0
      %202 = vmatpush1.msra.mxu0 0.0
      %203 = vmatprep.subr.mxu0 0.0
      %204 = vmatpush1.msra.mxu0 0.0
      %205 = vmatprep.subr.mxu0 0.0
      %206 = vmatpush1.msra.mxu0 0.0
      %207 = vmatprep.subr.mxu0 0.0
      %208 = vmatpush1.msra.mxu0 0.0
      %209 = vmatprep.subr.mxu0 0.0
      %210 = vmatpush1.msra.mxu0 0.0
      %211 = vmatprep.subr.mxu0 0.0
      %212 = vmatpush1.msra.mxu0 0.0
      %213 = vmatprep.subr.mxu0 0.0
      %214 = vmatpush1.msra.mxu0 0.0
      %215 = vmatprep.subr.mxu0 0.0
      %216 = vmatpush1.msra.mxu0 0.0
      %217 = vmatprep.subr.mxu0 0.0
      %218 = vmatpush1.msra.mxu0 0.0
      %219 = vmatprep.subr.mxu0 0.0
      %220 = vmatpush1.msra.mxu0 0.0
      %221 = vmatprep.subr.mxu0 0.0
      %222 = vmatpush1.msra.mxu0 0.0
      %223 = vmatprep.subr.mxu0 0.0
      %224 = vmatpush1.msra.mxu0 0.0
      %225 = vmatprep.subr.mxu0 %v191
      %226 = vmatpush1.msra.mxu0 %v189
      %227 = vmatprep.subr.mxu0 0.0
      %228 = vmatpush2.msra.mxu0 0.0
      %229 = vmatprep.subr.mxu0 0.0
      %230 = vmatpush2.msra.mxu0 0.0
      %231 = vmatprep.subr.mxu0 0.0
      %232 = vmatpush2.msra.mxu0 0.0
      %233 = vmatprep.subr.mxu0 0.0
      %234 = vmatpush2.msra.mxu0 0.0
      %235 = vmatprep.subr.mxu0 0.0
      %236 = vmatpush2.msra.mxu0 0.0
      %237 = vmatprep.subr.mxu0 0.0
      %238 = vmatpush2.msra.mxu0 0.0
      %239 = vmatprep.subr.mxu0 0.0
      %240 = vmatpush2.msra.mxu0 0.0
      %241 = vmatprep.subr.mxu0 0.0
      %242 = vmatpush2.msra.mxu0 0.0
      %243 = vmatprep.subr.mxu0 0.0
      %244 = vmatpush2.msra.mxu0 0.0
      %245 = vmatprep.subr.mxu0 0.0
      %246 = vmatpush2.msra.mxu0 0.0
      %247 = vmatprep.subr.mxu0 0.0
      %248 = vmatpush2.msra.mxu0 0.0
      %249 = vmatprep.subr.mxu0 0.0
      %250 = vmatpush2.msra.mxu0 0.0
      %251 = vmatprep.subr.mxu0 0.0
      %252 = vmatpush2.msra.mxu0 0.0
      %253 = vmatprep.subr.mxu0 0.0
      %254 = vmatpush2.msra.mxu0 0.0
      %255 = vmatprep.subr.mxu0 0.0
      %256 = vmatpush2.msra.mxu0 0.0
      %257 = vmatprep.subr.mxu0 0.0
      %258 = vmatpush2.msra.mxu0 0.0
      %259 = vmatprep.mubr.f32.mxu0 0.0
      %260 = vmatmul.mubr.f32.gmra.mxu0 %v186
      %v261 = vpop.f32.mrf.mxu0
      %v262 = vadd.f32 0.0, %v261
      %v263 = vpop.f32.mrf.mxu0
      %v264 = vadd.f32 0.0, %v263
      %265 = vdwg.mxu0
      %266 = vmatprep.subr.mxu0 0.0
      %267 = vmatpush1.msra.mxu0 0.0
      %268 = vmatprep.subr.mxu0 0.0
      %269 = vmatpush1.msra.mxu0 0.0
      %270 = vmatprep.subr.mxu0 0.0
      %271 = vmatpush1.msra.mxu0 0.0
      %272 = vmatprep.subr.mxu0 0.0
      %273 = vmatpush1.msra.mxu0 0.0
      %274 = vmatprep.subr.mxu0 0.0
      %275 = vmatpush1.msra.mxu0 0.0
      %276 = vmatprep.subr.mxu0 0.0
      %277 = vmatpush1.msra.mxu0 0.0
      %278 = vmatprep.subr.mxu0 0.0
      %279 = vmatpush1.msra.mxu0 0.0
      %280 = vmatprep.subr.mxu0 0.0
      %281 = vmatpush1.msra.mxu0 0.0
      %282 = vmatprep.subr.mxu0 0.0
      %283 = vmatpush1.msra.mxu0 0.0
      %284 = vmatprep.subr.mxu0 0.0
      %285 = vmatpush1.msra.mxu0 0.0
      %286 = vmatprep.subr.mxu0 0.0
      %287 = vmatpush1.msra.mxu0 0.0
      %288 = vmatprep.subr.mxu0 0.0
      %289 = vmatpush1.msra.mxu0 0.0
      %290 = vmatprep.subr.mxu0 0.0
      %291 = vmatpush1.msra.mxu0 0.0
      %292 = vmatprep.subr.mxu0 0.0
      %293 = vmatpush1.msra.mxu0 0.0
      %294 = vmatprep.subr.mxu0 0.0
      %295 = vmatpush1.msra.mxu0 0.0
      %296 = vmatprep.subr.mxu0 0.0
      %297 = vmatpush1.msra.mxu0 %v193
      %298 = vmatprep.subr.mxu0 0.0
      %299 = vmatpush2.msra.mxu0 0.0
      %300 = vmatprep.subr.mxu0 0.0
      %301 = vmatpush2.msra.mxu0 0.0
      %302 = vmatprep.subr.mxu0 0.0
      %303 = vmatpush2.msra.mxu0 0.0
      %304 = vmatprep.subr.mxu0 0.0
      %305 = vmatpush2.msra.mxu0 0.0
      %306 = vmatprep.subr.mxu0 0.0
      %307 = vmatpush2.msra.mxu0 0.0
      %308 = vmatprep.subr.mxu0 0.0
      %309 = vmatpush2.msra.mxu0 0.0
      %310 = vmatprep.subr.mxu0 0.0
      %311 = vmatpush2.msra.mxu0 0.0
      %312 = vmatprep.subr.mxu0 0.0
      %313 = vmatpush2.msra.mxu0 0.0
      %314 = vmatprep.subr.mxu0 0.0
      %315 = vmatpush2.msra.mxu0 0.0
      %316 = vmatprep.subr.mxu0 0.0
      %317 = vmatpush2.msra.mxu0 0.0
      %318 = vmatprep.subr.mxu0 0.0
      %319 = vmatpush2.msra.mxu0 0.0
      %320 = vmatprep.subr.mxu0 0.0
      %321 = vmatpush2.msra.mxu0 0.0
      %322 = vmatprep.subr.mxu0 0.0
      %323 = vmatpush2.msra.mxu0 0.0
      %324 = vmatprep.subr.mxu0 0.0
      %325 = vmatpush2.msra.mxu0 0.0
      %326 = vmatprep.subr.mxu0 0.0
      %327 = vmatpush2.msra.mxu0 0.0
      %328 = vmatprep.subr.mxu0 0.0
      %329 = vmatpush2.msra.mxu0 0.0
      %330 = vmatprep.mubr.f32.mxu0 0.0
      %331 = vmatmul.mubr.f32.gmra.mxu0 %v186
      %v332 = vpop.f32.mrf.mxu0
      %v333 = vadd.f32 0.0, %v332
      %v334 = vpop.f32.mrf.mxu0
      %335 = vdwg.mxu0
      %v336 = vadd.f32 %v177, %v262
      %v337 = vadd.f32 %v177, %v264
      %v338 = vadd.f32 %v177, %v333
      %v339 = vld [vmem:[%s165] sm:$0xff]
      %v340 = vld [vmem:[%s165 + $0x8] sm:$0xf]
      %s341 = scalar_lea.vmem %s1, 8
      %v342 = vld [vmem:[%s341] sm:$0xff]
      %v345 = vcombine.high %v339, %v339
      %346 = vrot.lane.b32.xlu0 %v339, 127
      %v347 = vpop.permute.xlu0 %346
      %348 = vrot.lane.b32.xlu0 %v345, 127
      %v349 = vpop.permute.xlu0 %348
      %350 = vrot.lane.b32.xlu0 %v340, 127
      %v351 = vpop.permute.xlu0 %350
      %vm352 = vcmask 1039360
      %v353 = vsel %vm352, %v347, %v349
      %v354 = vsel %vm352, %v349, %v351
      %v356 = vsel %vm184, %v342, 0
      %v358 = vsel %vm188, %v353, 0
      %v360 = vsel %vm188, %v354, 0
      %v362 = vsel %vm188, %v351, 0
      %364 = vmatprep.subr.mxu0 0.0
      %365 = vmatpush1.msra.mxu0 0.0
      %366 = vmatprep.subr.mxu0 0.0
      %367 = vmatpush1.msra.mxu0 0.0
      %368 = vmatprep.subr.mxu0 0.0
      %369 = vmatpush1.msra.mxu0 0.0
      %370 = vmatprep.subr.mxu0 0.0
      %371 = vmatpush1.msra.mxu0 0.0
      %372 = vmatprep.subr.mxu0 0.0
      %373 = vmatpush1.msra.mxu0 0.0
      %374 = vmatprep.subr.mxu0 0.0
      %375 = vmatpush1.msra.mxu0 0.0
      %376 = vmatprep.subr.mxu0 0.0
      %377 = vmatpush1.msra.mxu0 0.0
      %378 = vmatprep.subr.mxu0 0.0
      %379 = vmatpush1.msra.mxu0 0.0
      %380 = vmatprep.subr.mxu0 0.0
      %381 = vmatpush1.msra.mxu0 0.0
      %382 = vmatprep.subr.mxu0 0.0
      %383 = vmatpush1.msra.mxu0 0.0
      %384 = vmatprep.subr.mxu0 0.0
      %385 = vmatpush1.msra.mxu0 0.0
      %386 = vmatprep.subr.mxu0 0.0
      %387 = vmatpush1.msra.mxu0 0.0
      %388 = vmatprep.subr.mxu0 0.0
      %389 = vmatpush1.msra.mxu0 0.0
      %390 = vmatprep.subr.mxu0 0.0
      %391 = vmatpush1.msra.mxu0 0.0
      %392 = vmatprep.subr.mxu0 0.0
      %393 = vmatpush1.msra.mxu0 0.0
      %394 = vmatprep.subr.mxu0 %v360
      %395 = vmatpush1.msra.mxu0 %v358
      %396 = vmatprep.subr.mxu0 0.0
      %397 = vmatpush2.msra.mxu0 0.0
      %398 = vmatprep.subr.mxu0 0.0
      %399 = vmatpush2.msra.mxu0 0.0
      %400 = vmatprep.subr.mxu0 0.0
      %401 = vmatpush2.msra.mxu0 0.0
      %402 = vmatprep.subr.mxu0 0.0
      %403 = vmatpush2.msra.mxu0 0.0
      %404 = vmatprep.subr.mxu0 0.0
      %405 = vmatpush2.msra.mxu0 0.0
      %406 = vmatprep.subr.mxu0 0.0
      %407 = vmatpush2.msra.mxu0 0.0
      %408 = vmatprep.subr.mxu0 0.0
      %409 = vmatpush2.msra.mxu0 0.0
      %410 = vmatprep.subr.mxu0 0.0
      %411 = vmatpush2.msra.mxu0 0.0
      %412 = vmatprep.subr.mxu0 0.0
      %413 = vmatpush2.msra.mxu0 0.0
      %414 = vmatprep.subr.mxu0 0.0
      %415 = vmatpush2.msra.mxu0 0.0
      %416 = vmatprep.subr.mxu0 0.0
      %417 = vmatpush2.msra.mxu0 0.0
      %418 = vmatprep.subr.mxu0 0.0
      %419 = vmatpush2.msra.mxu0 0.0
      %420 = vmatprep.subr.mxu0 0.0
      %421 = vmatpush2.msra.mxu0 0.0
      %422 = vmatprep.subr.mxu0 0.0
      %423 = vmatpush2.msra.mxu0 0.0
      %424 = vmatprep.subr.mxu0 0.0
      %425 = vmatpush2.msra.mxu0 0.0
      %426 = vmatprep.subr.mxu0 0.0
      %427 = vmatpush2.msra.mxu0 0.0
      %428 = vmatprep.mubr.f32.mxu0 0.0
      %429 = vmatmul.mubr.f32.gmra.mxu0 %v356
      %v430 = vpop.f32.mrf.mxu0
      %v431 = vadd.f32 0.0, %v430
      %v432 = vpop.f32.mrf.mxu0
      %v433 = vadd.f32 0.0, %v432
      %434 = vdwg.mxu0
      %435 = vmatprep.subr.mxu0 0.0
      %436 = vmatpush1.msra.mxu0 0.0
      %437 = vmatprep.subr.mxu0 0.0
      %438 = vmatpush1.msra.mxu0 0.0
      %439 = vmatprep.subr.mxu0 0.0
      %440 = vmatpush1.msra.mxu0 0.0
      %441 = vmatprep.subr.mxu0 0.0
      %442 = vmatpush1.msra.mxu0 0.0
      %443 = vmatprep.subr.mxu0 0.0
      %444 = vmatpush1.msra.mxu0 0.0
      %445 = vmatprep.subr.mxu0 0.0
      %446 = vmatpush1.msra.mxu0 0.0
      %447 = vmatprep.subr.mxu0 0.0
      %448 = vmatpush1.msra.mxu0 0.0
      %449 = vmatprep.subr.mxu0 0.0
      %450 = vmatpush1.msra.mxu0 0.0
      %451 = vmatprep.subr.mxu0 0.0
      %452 = vmatpush1.msra.mxu0 0.0
      %453 = vmatprep.subr.mxu0 0.0
      %454 = vmatpush1.msra.mxu0 0.0
      %455 = vmatprep.subr.mxu0 0.0
      %456 = vmatpush1.msra.mxu0 0.0
      %457 = vmatprep.subr.mxu0 0.0
      %458 = vmatpush1.msra.mxu0 0.0
      %459 = vmatprep.subr.mxu0 0.0
      %460 = vmatpush1.msra.mxu0 0.0
      %461 = vmatprep.subr.mxu0 0.0
      %462 = vmatpush1.msra.mxu0 0.0
      %463 = vmatprep.subr.mxu0 0.0
      %464 = vmatpush1.msra.mxu0 0.0
      %465 = vmatprep.subr.mxu0 0.0
      %466 = vmatpush1.msra.mxu0 %v362
      %467 = vmatprep.subr.mxu0 0.0
      %468 = vmatpush2.msra.mxu0 0.0
      %469 = vmatprep.subr.mxu0 0.0
      %470 = vmatpush2.msra.mxu0 0.0
      %471 = vmatprep.subr.mxu0 0.0
      %472 = vmatpush2.msra.mxu0 0.0
      %473 = vmatprep.subr.mxu0 0.0
      %474 = vmatpush2.msra.mxu0 0.0
      %475 = vmatprep.subr.mxu0 0.0
      %476 = vmatpush2.msra.mxu0 0.0
      %477 = vmatprep.subr.mxu0 0.0
      %478 = vmatpush2.msra.mxu0 0.0
      %479 = vmatprep.subr.mxu0 0.0
      %480 = vmatpush2.msra.mxu0 0.0
      %481 = vmatprep.subr.mxu0 0.0
      %482 = vmatpush2.msra.mxu0 0.0
      %483 = vmatprep.subr.mxu0 0.0
      %484 = vmatpush2.msra.mxu0 0.0
      %485 = vmatprep.subr.mxu0 0.0
      %486 = vmatpush2.msra.mxu0 0.0
      %487 = vmatprep.subr.mxu0 0.0
      %488 = vmatpush2.msra.mxu0 0.0
      %489 = vmatprep.subr.mxu0 0.0
      %490 = vmatpush2.msra.mxu0 0.0
      %491 = vmatprep.subr.mxu0 0.0
      %492 = vmatpush2.msra.mxu0 0.0
      %493 = vmatprep.subr.mxu0 0.0
      %494 = vmatpush2.msra.mxu0 0.0
      %495 = vmatprep.subr.mxu0 0.0
      %496 = vmatpush2.msra.mxu0 0.0
      %497 = vmatprep.subr.mxu0 0.0
      %498 = vmatpush2.msra.mxu0 0.0
      %499 = vmatprep.mubr.f32.mxu0 0.0
      %500 = vmatmul.mubr.f32.gmra.mxu0 %v356
      %v501 = vpop.f32.mrf.mxu0
      %v502 = vadd.f32 0.0, %v501
      %v503 = vpop.f32.mrf.mxu0
      %504 = vdwg.mxu0
      %v505 = vadd.f32 %v336, %v431
      %v506 = vadd.f32 %v337, %v433
      %v507 = vadd.f32 %v338, %v502
      %v508 = vld [vmem:[%s165] sm:$0xff]
      %v509 = vld [vmem:[%s165 + $0x8] sm:$0xf]
      %s510 = scalar_lea.vmem %s1, 16
      %v511 = vld [vmem:[%s510] sm:$0xff]
      %v514 = vcombine.high %v508, %v508
      %515 = vrot.lane.b32.xlu0 %v508, 126
      %v516 = vpop.permute.xlu0 %515
      %517 = vrot.lane.b32.xlu0 %v514, 126
      %v518 = vpop.permute.xlu0 %517
      %519 = vrot.lane.b32.xlu0 %v509, 126
      %v520 = vpop.permute.xlu0 %519
      %vm521 = vcmask 1031168
      %v522 = vsel %vm521, %v516, %v518
      %v523 = vsel %vm521, %v518, %v520
      %v525 = vsel %vm184, %v511, 0
      %v527 = vsel %vm188, %v522, 0
      %v529 = vsel %vm188, %v523, 0
      %v531 = vsel %vm188, %v520, 0
      %533 = vmatprep.subr.mxu0 0.0
      %534 = vmatpush1.msra.mxu0 0.0
      %535 = vmatprep.subr.mxu0 0.0
      %536 = vmatpush1.msra.mxu0 0.0
      %537 = vmatprep.subr.mxu0 0.0
      %538 = vmatpush1.msra.mxu0 0.0
      %539 = vmatprep.subr.mxu0 0.0
      %540 = vmatpush1.msra.mxu0 0.0
      %541 = vmatprep.subr.mxu0 0.0
      %542 = vmatpush1.msra.mxu0 0.0
      %543 = vmatprep.subr.mxu0 0.0
      %544 = vmatpush1.msra.mxu0 0.0
      %545 = vmatprep.subr.mxu0 0.0
      %546 = vmatpush1.msra.mxu0 0.0
      %547 = vmatprep.subr.mxu0 0.0
      %548 = vmatpush1.msra.mxu0 0.0
      %549 = vmatprep.subr.mxu0 0.0
      %550 = vmatpush1.msra.mxu0 0.0
      %551 = vmatprep.subr.mxu0 0.0
      %552 = vmatpush1.msra.mxu0 0.0
      %553 = vmatprep.subr.mxu0 0.0
      %554 = vmatpush1.msra.mxu0 0.0
      %555 = vmatprep.subr.mxu0 0.0
      %556 = vmatpush1.msra.mxu0 0.0
      %557 = vmatprep.subr.mxu0 0.0
      %558 = vmatpush1.msra.mxu0 0.0
      %559 = vmatprep.subr.mxu0 0.0
      %560 = vmatpush1.msra.mxu0 0.0
      %561 = vmatprep.subr.mxu0 0.0
      %562 = vmatpush1.msra.mxu0 0.0
      %563 = vmatprep.subr.mxu0 %v529
      %564 = vmatpush1.msra.mxu0 %v527
      %565 = vmatprep.subr.mxu0 0.0
      %566 = vmatpush2.msra.mxu0 0.0
      %567 = vmatprep.subr.mxu0 0.0
      %568 = vmatpush2.msra.mxu0 0.0
      %569 = vmatprep.subr.mxu0 0.0
      %570 = vmatpush2.msra.mxu0 0.0
      %571 = vmatprep.subr.mxu0 0.0
      %572 = vmatpush2.msra.mxu0 0.0
      %573 = vmatprep.subr.mxu0 0.0
      %574 = vmatpush2.msra.mxu0 0.0
      %575 = vmatprep.subr.mxu0 0.0
      %576 = vmatpush2.msra.mxu0 0.0
      %577 = vmatprep.subr.mxu0 0.0
      %578 = vmatpush2.msra.mxu0 0.0
      %579 = vmatprep.subr.mxu0 0.0
      %580 = vmatpush2.msra.mxu0 0.0
      %581 = vmatprep.subr.mxu0 0.0
      %582 = vmatpush2.msra.mxu0 0.0
      %583 = vmatprep.subr.mxu0 0.0
      %584 = vmatpush2.msra.mxu0 0.0
      %585 = vmatprep.subr.mxu0 0.0
      %586 = vmatpush2.msra.mxu0 0.0
      %587 = vmatprep.subr.mxu0 0.0
      %588 = vmatpush2.msra.mxu0 0.0
      %589 = vmatprep.subr.mxu0 0.0
      %590 = vmatpush2.msra.mxu0 0.0
      %591 = vmatprep.subr.mxu0 0.0
      %592 = vmatpush2.msra.mxu0 0.0
      %593 = vmatprep.subr.mxu0 0.0
      %594 = vmatpush2.msra.mxu0 0.0
      %595 = vmatprep.subr.mxu0 0.0
      %596 = vmatpush2.msra.mxu0 0.0
      %597 = vmatprep.mubr.f32.mxu0 0.0
      %598 = vmatmul.mubr.f32.gmra.mxu0 %v525
      %v599 = vpop.f32.mrf.mxu0
      %v600 = vadd.f32 0.0, %v599
      %v601 = vpop.f32.mrf.mxu0
      %v602 = vadd.f32 0.0, %v601
      %603 = vdwg.mxu0
      %604 = vmatprep.subr.mxu0 0.0
      %605 = vmatpush1.msra.mxu0 0.0
      %606 = vmatprep.subr.mxu0 0.0
      %607 = vmatpush1.msra.mxu0 0.0
      %608 = vmatprep.subr.mxu0 0.0
      %609 = vmatpush1.msra.mxu0 0.0
      %610 = vmatprep.subr.mxu0 0.0
      %611 = vmatpush1.msra.mxu0 0.0
      %612 = vmatprep.subr.mxu0 0.0
      %613 = vmatpush1.msra.mxu0 0.0
      %614 = vmatprep.subr.mxu0 0.0
      %615 = vmatpush1.msra.mxu0 0.0
      %616 = vmatprep.subr.mxu0 0.0
      %617 = vmatpush1.msra.mxu0 0.0
      %618 = vmatprep.subr.mxu0 0.0
      %619 = vmatpush1.msra.mxu0 0.0
      %620 = vmatprep.subr.mxu0 0.0
      %621 = vmatpush1.msra.mxu0 0.0
      %622 = vmatprep.subr.mxu0 0.0
      %623 = vmatpush1.msra.mxu0 0.0
      %624 = vmatprep.subr.mxu0 0.0
      %625 = vmatpush1.msra.mxu0 0.0
      %626 = vmatprep.subr.mxu0 0.0
      %627 = vmatpush1.msra.mxu0 0.0
      %628 = vmatprep.subr.mxu0 0.0
      %629 = vmatpush1.msra.mxu0 0.0
      %630 = vmatprep.subr.mxu0 0.0
      %631 = vmatpush1.msra.mxu0 0.0
      %632 = vmatprep.subr.mxu0 0.0
      %633 = vmatpush1.msra.mxu0 0.0
      %634 = vmatprep.subr.mxu0 0.0
      %635 = vmatpush1.msra.mxu0 %v531
      %636 = vmatprep.subr.mxu0 0.0
      %637 = vmatpush2.msra.mxu0 0.0
      %638 = vmatprep.subr.mxu0 0.0
      %639 = vmatpush2.msra.mxu0 0.0
      %640 = vmatprep.subr.mxu0 0.0
      %641 = vmatpush2.msra.mxu0 0.0
      %642 = vmatprep.subr.mxu0 0.0
      %643 = vmatpush2.msra.mxu0 0.0
      %644 = vmatprep.subr.mxu0 0.0
      %645 = vmatpush2.msra.mxu0 0.0
      %646 = vmatprep.subr.mxu0 0.0
      %647 = vmatpush2.msra.mxu0 0.0
      %648 = vmatprep.subr.mxu0 0.0
      %649 = vmatpush2.msra.mxu0 0.0
      %650 = vmatprep.subr.mxu0 0.0
      %651 = vmatpush2.msra.mxu0 0.0
      %652 = vmatprep.subr.mxu0 0.0
      %653 = vmatpush2.msra.mxu0 0.0
      %654 = vmatprep.subr.mxu0 0.0
      %655 = vmatpush2.msra.mxu0 0.0
      %656 = vmatprep.subr.mxu0 0.0
      %657 = vmatpush2.msra.mxu0 0.0
      %658 = vmatprep.subr.mxu0 0.0
      %659 = vmatpush2.msra.mxu0 0.0
      %660 = vmatprep.subr.mxu0 0.0
      %661 = vmatpush2.msra.mxu0 0.0
      %662 = vmatprep.subr.mxu0 0.0
      %663 = vmatpush2.msra.mxu0 0.0
      %664 = vmatprep.subr.mxu0 0.0
      %665 = vmatpush2.msra.mxu0 0.0
      %666 = vmatprep.subr.mxu0 0.0
      %667 = vmatpush2.msra.mxu0 0.0
      %668 = vmatprep.mubr.f32.mxu0 0.0
      %669 = vmatmul.mubr.f32.gmra.mxu0 %v525
      %v670 = vpop.f32.mrf.mxu0
      %v671 = vadd.f32 0.0, %v670
      %v672 = vpop.f32.mrf.mxu0
      %673 = vdwg.mxu0
      %v674 = vadd.f32 %v505, %v600
      %v675 = vadd.f32 %v506, %v602
      %v676 = vadd.f32 %v507, %v671
      %v677 = vld [vmem:[%s165] sm:$0xff]
      %v678 = vld [vmem:[%s165 + $0x8] sm:$0xf]
      %s679 = scalar_lea.vmem %s1, 24
      %v680 = vld [vmem:[%s679] sm:$0xff]
      %v683 = vcombine.high %v677, %v677
      %684 = vrot.lane.b32.xlu0 %v677, 110
      %v685 = vpop.permute.xlu0 %684
      %686 = vrot.lane.b32.xlu0 %v683, 110
      %v687 = vpop.permute.xlu0 %686
      %688 = vrot.lane.b32.xlu0 %v678, 110
      %v689 = vpop.permute.xlu0 %688
      %vm690 = vcmask 900096
      %v691 = vsel %vm690, %v685, %v687
      %v692 = vsel %vm690, %v687, %v689
      %v694 = vsel %vm184, %v680, 0
      %v696 = vsel %vm188, %v691, 0
      %v698 = vsel %vm188, %v692, 0
      %v700 = vsel %vm188, %v689, 0
      %702 = vmatprep.subr.mxu0 0.0
      %703 = vmatpush1.msra.mxu0 0.0
      %704 = vmatprep.subr.mxu0 0.0
      %705 = vmatpush1.msra.mxu0 0.0
      %706 = vmatprep.subr.mxu0 0.0
      %707 = vmatpush1.msra.mxu0 0.0
      %708 = vmatprep.subr.mxu0 0.0
      %709 = vmatpush1.msra.mxu0 0.0
      %710 = vmatprep.subr.mxu0 0.0
      %711 = vmatpush1.msra.mxu0 0.0
      %712 = vmatprep.subr.mxu0 0.0
      %713 = vmatpush1.msra.mxu0 0.0
      %714 = vmatprep.subr.mxu0 0.0
      %715 = vmatpush1.msra.mxu0 0.0
      %716 = vmatprep.subr.mxu0 0.0
      %717 = vmatpush1.msra.mxu0 0.0
      %718 = vmatprep.subr.mxu0 0.0
      %719 = vmatpush1.msra.mxu0 0.0
      %720 = vmatprep.subr.mxu0 0.0
      %721 = vmatpush1.msra.mxu0 0.0
      %722 = vmatprep.subr.mxu0 0.0
      %723 = vmatpush1.msra.mxu0 0.0
      %724 = vmatprep.subr.mxu0 0.0
      %725 = vmatpush1.msra.mxu0 0.0
      %726 = vmatprep.subr.mxu0 0.0
      %727 = vmatpush1.msra.mxu0 0.0
      %728 = vmatprep.subr.mxu0 0.0
      %729 = vmatpush1.msra.mxu0 0.0
      %730 = vmatprep.subr.mxu0 0.0
      %731 = vmatpush1.msra.mxu0 0.0
      %732 = vmatprep.subr.mxu0 %v698
      %733 = vmatpush1.msra.mxu0 %v696
      %734 = vmatprep.subr.mxu0 0.0
      %735 = vmatpush2.msra.mxu0 0.0
      %736 = vmatprep.subr.mxu0 0.0
      %737 = vmatpush2.msra.mxu0 0.0
      %738 = vmatprep.subr.mxu0 0.0
      %739 = vmatpush2.msra.mxu0 0.0
      %740 = vmatprep.subr.mxu0 0.0
      %741 = vmatpush2.msra.mxu0 0.0
      %742 = vmatprep.subr.mxu0 0.0
      %743 = vmatpush2.msra.mxu0 0.0
      %744 = vmatprep.subr.mxu0 0.0
      %745 = vmatpush2.msra.mxu0 0.0
      %746 = vmatprep.subr.mxu0 0.0
      %747 = vmatpush2.msra.mxu0 0.0
      %748 = vmatprep.subr.mxu0 0.0
      %749 = vmatpush2.msra.mxu0 0.0
      %750 = vmatprep.subr.mxu0 0.0
      %751 = vmatpush2.msra.mxu0 0.0
      %752 = vmatprep.subr.mxu0 0.0
      %753 = vmatpush2.msra.mxu0 0.0
      %754 = vmatprep.subr.mxu0 0.0
      %755 = vmatpush2.msra.mxu0 0.0
      %756 = vmatprep.subr.mxu0 0.0
      %757 = vmatpush2.msra.mxu0 0.0
      %758 = vmatprep.subr.mxu0 0.0
      %759 = vmatpush2.msra.mxu0 0.0
      %760 = vmatprep.subr.mxu0 0.0
      %761 = vmatpush2.msra.mxu0 0.0
      %762 = vmatprep.subr.mxu0 0.0
      %763 = vmatpush2.msra.mxu0 0.0
      %764 = vmatprep.subr.mxu0 0.0
      %765 = vmatpush2.msra.mxu0 0.0
      %766 = vmatprep.mubr.f32.mxu0 0.0
      %767 = vmatmul.mubr.f32.gmra.mxu0 %v694
      %v768 = vpop.f32.mrf.mxu0
      %v769 = vadd.f32 0.0, %v768
      %v770 = vpop.f32.mrf.mxu0
      %v771 = vadd.f32 0.0, %v770
      %772 = vdwg.mxu0
      %773 = vmatprep.subr.mxu0 0.0
      %774 = vmatpush1.msra.mxu0 0.0
      %775 = vmatprep.subr.mxu0 0.0
      %776 = vmatpush1.msra.mxu0 0.0
      %777 = vmatprep.subr.mxu0 0.0
      %778 = vmatpush1.msra.mxu0 0.0
      %779 = vmatprep.subr.mxu0 0.0
      %780 = vmatpush1.msra.mxu0 0.0
      %781 = vmatprep.subr.mxu0 0.0
      %782 = vmatpush1.msra.mxu0 0.0
      %783 = vmatprep.subr.mxu0 0.0
      %784 = vmatpush1.msra.mxu0 0.0
      %785 = vmatprep.subr.mxu0 0.0
      %786 = vmatpush1.msra.mxu0 0.0
      %787 = vmatprep.subr.mxu0 0.0
      %788 = vmatpush1.msra.mxu0 0.0
      %789 = vmatprep.subr.mxu0 0.0
      %790 = vmatpush1.msra.mxu0 0.0
      %791 = vmatprep.subr.mxu0 0.0
      %792 = vmatpush1.msra.mxu0 0.0
      %793 = vmatprep.subr.mxu0 0.0
      %794 = vmatpush1.msra.mxu0 0.0
      %795 = vmatprep.subr.mxu0 0.0
      %796 = vmatpush1.msra.mxu0 0.0
      %797 = vmatprep.subr.mxu0 0.0
      %798 = vmatpush1.msra.mxu0 0.0
      %799 = vmatprep.subr.mxu0 0.0
      %800 = vmatpush1.msra.mxu0 0.0
      %801 = vmatprep.subr.mxu0 0.0
      %802 = vmatpush1.msra.mxu0 0.0
      %803 = vmatprep.subr.mxu0 0.0
      %804 = vmatpush1.msra.mxu0 %v700
      %805 = vmatprep.subr.mxu0 0.0
      %806 = vmatpush2.msra.mxu0 0.0
      %807 = vmatprep.subr.mxu0 0.0
      %808 = vmatpush2.msra.mxu0 0.0
      %809 = vmatprep.subr.mxu0 0.0
      %810 = vmatpush2.msra.mxu0 0.0
      %811 = vmatprep.subr.mxu0 0.0
      %812 = vmatpush2.msra.mxu0 0.0
      %813 = vmatprep.subr.mxu0 0.0
      %814 = vmatpush2.msra.mxu0 0.0
      %815 = vmatprep.subr.mxu0 0.0
      %816 = vmatpush2.msra.mxu0 0.0
      %817 = vmatprep.subr.mxu0 0.0
      %818 = vmatpush2.msra.mxu0 0.0
      %819 = vmatprep.subr.mxu0 0.0
      %820 = vmatpush2.msra.mxu0 0.0
      %821 = vmatprep.subr.mxu0 0.0
      %822 = vmatpush2.msra.mxu0 0.0
      %823 = vmatprep.subr.mxu0 0.0
      %824 = vmatpush2.msra.mxu0 0.0
      %825 = vmatprep.subr.mxu0 0.0
      %826 = vmatpush2.msra.mxu0 0.0
      %827 = vmatprep.subr.mxu0 0.0
      %828 = vmatpush2.msra.mxu0 0.0
      %829 = vmatprep.subr.mxu0 0.0
      %830 = vmatpush2.msra.mxu0 0.0
      %831 = vmatprep.subr.mxu0 0.0
      %832 = vmatpush2.msra.mxu0 0.0
      %833 = vmatprep.subr.mxu0 0.0
      %834 = vmatpush2.msra.mxu0 0.0
      %835 = vmatprep.subr.mxu0 0.0
      %836 = vmatpush2.msra.mxu0 0.0
      %837 = vmatprep.mubr.f32.mxu0 0.0
      %838 = vmatmul.mubr.f32.gmra.mxu0 %v694
      %v839 = vpop.f32.mrf.mxu0
      %v840 = vadd.f32 0.0, %v839
      %v841 = vpop.f32.mrf.mxu0
      %842 = vdwg.mxu0
      %v843 = vadd.f32 %v674, %v769
      %v844 = vadd.f32 %v675, %v771
      %v845 = vadd.f32 %v676, %v840
      %v846 = vld [vmem:[%s165] sm:$0xff]
      %v847 = vld [vmem:[%s165 + $0x8] sm:$0xf]
      %s848 = scalar_lea.vmem %s1, 32
      %v849 = vld [vmem:[%s848] sm:$0xff]
      %v852 = vcombine.high %v846, %v846
      %853 = vrot.lane.b32.xlu0 %v846, 109
      %v854 = vpop.permute.xlu0 %853
      %855 = vrot.lane.b32.xlu0 %v852, 109
      %v856 = vpop.permute.xlu0 %855
      %857 = vrot.lane.b32.xlu0 %v847, 109
      %v858 = vpop.permute.xlu0 %857
      %vm859 = vcmask 891904
      %v860 = vsel %vm859, %v854, %v856
      %v861 = vsel %vm859, %v856, %v858
      %v863 = vsel %vm184, %v849, 0
      %v865 = vsel %vm188, %v860, 0
      %v867 = vsel %vm188, %v861, 0
      %v869 = vsel %vm188, %v858, 0
      %871 = vmatprep.subr.mxu0 0.0
      %872 = vmatpush1.msra.mxu0 0.0
      %873 = vmatprep.subr.mxu0 0.0
      %874 = vmatpush1.msra.mxu0 0.0
      %875 = vmatprep.subr.mxu0 0.0
      %876 = vmatpush1.msra.mxu0 0.0
      %877 = vmatprep.subr.mxu0 0.0
      %878 = vmatpush1.msra.mxu0 0.0
      %879 = vmatprep.subr.mxu0 0.0
      %880 = vmatpush1.msra.mxu0 0.0
      %881 = vmatprep.subr.mxu0 0.0
      %882 = vmatpush1.msra.mxu0 0.0
      %883 = vmatprep.subr.mxu0 0.0
      %884 = vmatpush1.msra.mxu0 0.0
      %885 = vmatprep.subr.mxu0 0.0
      %886 = vmatpush1.msra.mxu0 0.0
      %887 = vmatprep.subr.mxu0 0.0
      %888 = vmatpush1.msra.mxu0 0.0
      %889 = vmatprep.subr.mxu0 0.0
      %890 = vmatpush1.msra.mxu0 0.0
      %891 = vmatprep.subr.mxu0 0.0
      %892 = vmatpush1.msra.mxu0 0.0
      %893 = vmatprep.subr.mxu0 0.0
      %894 = vmatpush1.msra.mxu0 0.0
      %895 = vmatprep.subr.mxu0 0.0
      %896 = vmatpush1.msra.mxu0 0.0
      %897 = vmatprep.subr.mxu0 0.0
      %898 = vmatpush1.msra.mxu0 0.0
      %899 = vmatprep.subr.mxu0 0.0
      %900 = vmatpush1.msra.mxu0 0.0
      %901 = vmatprep.subr.mxu0 %v867
      %902 = vmatpush1.msra.mxu0 %v865
      %903 = vmatprep.subr.mxu0 0.0
      %904 = vmatpush2.msra.mxu0 0.0
      %905 = vmatprep.subr.mxu0 0.0
      %906 = vmatpush2.msra.mxu0 0.0
      %907 = vmatprep.subr.mxu0 0.0
      %908 = vmatpush2.msra.mxu0 0.0
      %909 = vmatprep.subr.mxu0 0.0
      %910 = vmatpush2.msra.mxu0 0.0
      %911 = vmatprep.subr.mxu0 0.0
      %912 = vmatpush2.msra.mxu0 0.0
      %913 = vmatprep.subr.mxu0 0.0
      %914 = vmatpush2.msra.mxu0 0.0
      %915 = vmatprep.subr.mxu0 0.0
      %916 = vmatpush2.msra.mxu0 0.0
      %917 = vmatprep.subr.mxu0 0.0
      %918 = vmatpush2.msra.mxu0 0.0
      %919 = vmatprep.subr.mxu0 0.0
      %920 = vmatpush2.msra.mxu0 0.0
      %921 = vmatprep.subr.mxu0 0.0
      %922 = vmatpush2.msra.mxu0 0.0
      %923 = vmatprep.subr.mxu0 0.0
      %924 = vmatpush2.msra.mxu0 0.0
      %925 = vmatprep.subr.mxu0 0.0
      %926 = vmatpush2.msra.mxu0 0.0
      %927 = vmatprep.subr.mxu0 0.0
      %928 = vmatpush2.msra.mxu0 0.0
      %929 = vmatprep.subr.mxu0 0.0
      %930 = vmatpush2.msra.mxu0 0.0
      %931 = vmatprep.subr.mxu0 0.0
      %932 = vmatpush2.msra.mxu0 0.0
      %933 = vmatprep.subr.mxu0 0.0
      %934 = vmatpush2.msra.mxu0 0.0
      %935 = vmatprep.mubr.f32.mxu0 0.0
      %936 = vmatmul.mubr.f32.gmra.mxu0 %v863
      %v937 = vpop.f32.mrf.mxu0
      %v938 = vadd.f32 0.0, %v937
      %v939 = vpop.f32.mrf.mxu0
      %v940 = vadd.f32 0.0, %v939
      %941 = vdwg.mxu0
      %942 = vmatprep.subr.mxu0 0.0
      %943 = vmatpush1.msra.mxu0 0.0
      %944 = vmatprep.subr.mxu0 0.0
      %945 = vmatpush1.msra.mxu0 0.0
      %946 = vmatprep.subr.mxu0 0.0
      %947 = vmatpush1.msra.mxu0 0.0
      %948 = vmatprep.subr.mxu0 0.0
      %949 = vmatpush1.msra.mxu0 0.0
      %950 = vmatprep.subr.mxu0 0.0
      %951 = vmatpush1.msra.mxu0 0.0
      %952 = vmatprep.subr.mxu0 0.0
      %953 = vmatpush1.msra.mxu0 0.0
      %954 = vmatprep.subr.mxu0 0.0
      %955 = vmatpush1.msra.mxu0 0.0
      %956 = vmatprep.subr.mxu0 0.0
      %957 = vmatpush1.msra.mxu0 0.0
      %958 = vmatprep.subr.mxu0 0.0
      %959 = vmatpush1.msra.mxu0 0.0
      %960 = vmatprep.subr.mxu0 0.0
      %961 = vmatpush1.msra.mxu0 0.0
      %962 = vmatprep.subr.mxu0 0.0
      %963 = vmatpush1.msra.mxu0 0.0
      %964 = vmatprep.subr.mxu0 0.0
      %965 = vmatpush1.msra.mxu0 0.0
      %966 = vmatprep.subr.mxu0 0.0
      %967 = vmatpush1.msra.mxu0 0.0
      %968 = vmatprep.subr.mxu0 0.0
      %969 = vmatpush1.msra.mxu0 0.0
      %970 = vmatprep.subr.mxu0 0.0
      %971 = vmatpush1.msra.mxu0 0.0
      %972 = vmatprep.subr.mxu0 0.0
      %973 = vmatpush1.msra.mxu0 %v869
      %974 = vmatprep.subr.mxu0 0.0
      %975 = vmatpush2.msra.mxu0 0.0
      %976 = vmatprep.subr.mxu0 0.0
      %977 = vmatpush2.msra.mxu0 0.0
      %978 = vmatprep.subr.mxu0 0.0
      %979 = vmatpush2.msra.mxu0 0.0
      %980 = vmatprep.subr.mxu0 0.0
      %981 = vmatpush2.msra.mxu0 0.0
      %982 = vmatprep.subr.mxu0 0.0
      %983 = vmatpush2.msra.mxu0 0.0
      %984 = vmatprep.subr.mxu0 0.0
      %985 = vmatpush2.msra.mxu0 0.0
      %986 = vmatprep.subr.mxu0 0.0
      %987 = vmatpush2.msra.mxu0 0.0
      %988 = vmatprep.subr.mxu0 0.0
      %989 = vmatpush2.msra.mxu0 0.0
      %990 = vmatprep.subr.mxu0 0.0
      %991 = vmatpush2.msra.mxu0 0.0
      %992 = vmatprep.subr.mxu0 0.0
      %993 = vmatpush2.msra.mxu0 0.0
      %994 = vmatprep.subr.mxu0 0.0
      %995 = vmatpush2.msra.mxu0 0.0
      %996 = vmatprep.subr.mxu0 0.0
      %997 = vmatpush2.msra.mxu0 0.0
      %998 = vmatprep.subr.mxu0 0.0
      %999 = vmatpush2.msra.mxu0 0.0
      %1000 = vmatprep.subr.mxu0 0.0
      %1001 = vmatpush2.msra.mxu0 0.0
      %1002 = vmatprep.subr.mxu0 0.0
      %1003 = vmatpush2.msra.mxu0 0.0
      %1004 = vmatprep.subr.mxu0 0.0
      %1005 = vmatpush2.msra.mxu0 0.0
      %1006 = vmatprep.mubr.f32.mxu0 0.0
      %1007 = vmatmul.mubr.f32.gmra.mxu0 %v863
      %v1008 = vpop.f32.mrf.mxu0
      %v1009 = vadd.f32 0.0, %v1008
      %v1010 = vpop.f32.mrf.mxu0
      %1011 = vdwg.mxu0
      %v1012 = vadd.f32 %v843, %v938
      %v1013 = vadd.f32 %v844, %v940
      %v1014 = vadd.f32 %v845, %v1009
      %v1015 = vld [vmem:[%s165] sm:$0xff]
      %v1016 = vld [vmem:[%s165 + $0x8] sm:$0xf]
      %s1017 = scalar_lea.vmem %s1, 40
      %v1018 = vld [vmem:[%s1017] sm:$0xff]
      %v1021 = vcombine.high %v1015, %v1015
      %1022 = vrot.lane.b32.xlu0 %v1015, 108
      %v1023 = vpop.permute.xlu0 %1022
      %1024 = vrot.lane.b32.xlu0 %v1021, 108
      %v1025 = vpop.permute.xlu0 %1024
      %1026 = vrot.lane.b32.xlu0 %v1016, 108
      %v1027 = vpop.permute.xlu0 %1026
      %vm1028 = vcmask 883712
      %v1029 = vsel %vm1028, %v1023, %v1025
      %v1030 = vsel %vm1028, %v1025, %v1027
      %v1032 = vsel %vm184, %v1018, 0
      %v1034 = vsel %vm188, %v1029, 0
      %v1036 = vsel %vm188, %v1030, 0
      %v1038 = vsel %vm188, %v1027, 0
      %1040 = vmatprep.subr.mxu0 0.0
      %1041 = vmatpush1.msra.mxu0 0.0
      %1042 = vmatprep.subr.mxu0 0.0
      %1043 = vmatpush1.msra.mxu0 0.0
      %1044 = vmatprep.subr.mxu0 0.0
      %1045 = vmatpush1.msra.mxu0 0.0
      %1046 = vmatprep.subr.mxu0 0.0
      %1047 = vmatpush1.msra.mxu0 0.0
      %1048 = vmatprep.subr.mxu0 0.0
      %1049 = vmatpush1.msra.mxu0 0.0
      %1050 = vmatprep.subr.mxu0 0.0
      %1051 = vmatpush1.msra.mxu0 0.0
      %1052 = vmatprep.subr.mxu0 0.0
      %1053 = vmatpush1.msra.mxu0 0.0
      %1054 = vmatprep.subr.mxu0 0.0
      %1055 = vmatpush1.msra.mxu0 0.0
      %1056 = vmatprep.subr.mxu0 0.0
      %1057 = vmatpush1.msra.mxu0 0.0
      %1058 = vmatprep.subr.mxu0 0.0
      %1059 = vmatpush1.msra.mxu0 0.0
      %1060 = vmatprep.subr.mxu0 0.0
      %1061 = vmatpush1.msra.mxu0 0.0
      %1062 = vmatprep.subr.mxu0 0.0
      %1063 = vmatpush1.msra.mxu0 0.0
      %1064 = vmatprep.subr.mxu0 0.0
      %1065 = vmatpush1.msra.mxu0 0.0
      %1066 = vmatprep.subr.mxu0 0.0
      %1067 = vmatpush1.msra.mxu0 0.0
      %1068 = vmatprep.subr.mxu0 0.0
      %1069 = vmatpush1.msra.mxu0 0.0
      %1070 = vmatprep.subr.mxu0 %v1036
      %1071 = vmatpush1.msra.mxu0 %v1034
      %1072 = vmatprep.subr.mxu0 0.0
      %1073 = vmatpush2.msra.mxu0 0.0
      %1074 = vmatprep.subr.mxu0 0.0
      %1075 = vmatpush2.msra.mxu0 0.0
      %1076 = vmatprep.subr.mxu0 0.0
      %1077 = vmatpush2.msra.mxu0 0.0
      %1078 = vmatprep.subr.mxu0 0.0
      %1079 = vmatpush2.msra.mxu0 0.0
      %1080 = vmatprep.subr.mxu0 0.0
      %1081 = vmatpush2.msra.mxu0 0.0
      %1082 = vmatprep.subr.mxu0 0.0
      %1083 = vmatpush2.msra.mxu0 0.0
      %1084 = vmatprep.subr.mxu0 0.0
      %1085 = vmatpush2.msra.mxu0 0.0
      %1086 = vmatprep.subr.mxu0 0.0
      %1087 = vmatpush2.msra.mxu0 0.0
      %1088 = vmatprep.subr.mxu0 0.0
      %1089 = vmatpush2.msra.mxu0 0.0
      %1090 = vmatprep.subr.mxu0 0.0
      %1091 = vmatpush2.msra.mxu0 0.0
      %1092 = vmatprep.subr.mxu0 0.0
      %1093 = vmatpush2.msra.mxu0 0.0
      %1094 = vmatprep.subr.mxu0 0.0
      %1095 = vmatpush2.msra.mxu0 0.0
      %1096 = vmatprep.subr.mxu0 0.0
      %1097 = vmatpush2.msra.mxu0 0.0
      %1098 = vmatprep.subr.mxu0 0.0
      %1099 = vmatpush2.msra.mxu0 0.0
      %1100 = vmatprep.subr.mxu0 0.0
      %1101 = vmatpush2.msra.mxu0 0.0
      %1102 = vmatprep.subr.mxu0 0.0
      %1103 = vmatpush2.msra.mxu0 0.0
      %1104 = vmatprep.mubr.f32.mxu0 0.0
      %1105 = vmatmul.mubr.f32.gmra.mxu0 %v1032
      %v1106 = vpop.f32.mrf.mxu0
      %v1107 = vadd.f32 0.0, %v1106
      %v1108 = vpop.f32.mrf.mxu0
      %v1109 = vadd.f32 0.0, %v1108
      %1110 = vdwg.mxu0
      %1111 = vmatprep.subr.mxu0 0.0
      %1112 = vmatpush1.msra.mxu0 0.0
      %1113 = vmatprep.subr.mxu0 0.0
      %1114 = vmatpush1.msra.mxu0 0.0
      %1115 = vmatprep.subr.mxu0 0.0
      %1116 = vmatpush1.msra.mxu0 0.0
      %1117 = vmatprep.subr.mxu0 0.0
      %1118 = vmatpush1.msra.mxu0 0.0
      %1119 = vmatprep.subr.mxu0 0.0
      %1120 = vmatpush1.msra.mxu0 0.0
      %1121 = vmatprep.subr.mxu0 0.0
      %1122 = vmatpush1.msra.mxu0 0.0
      %1123 = vmatprep.subr.mxu0 0.0
      %1124 = vmatpush1.msra.mxu0 0.0
      %1125 = vmatprep.subr.mxu0 0.0
      %1126 = vmatpush1.msra.mxu0 0.0
      %1127 = vmatprep.subr.mxu0 0.0
      %1128 = vmatpush1.msra.mxu0 0.0
      %1129 = vmatprep.subr.mxu0 0.0
      %1130 = vmatpush1.msra.mxu0 0.0
      %1131 = vmatprep.subr.mxu0 0.0
      %1132 = vmatpush1.msra.mxu0 0.0
      %1133 = vmatprep.subr.mxu0 0.0
      %1134 = vmatpush1.msra.mxu0 0.0
      %1135 = vmatprep.subr.mxu0 0.0
      %1136 = vmatpush1.msra.mxu0 0.0
      %1137 = vmatprep.subr.mxu0 0.0
      %1138 = vmatpush1.msra.mxu0 0.0
      %1139 = vmatprep.subr.mxu0 0.0
      %1140 = vmatpush1.msra.mxu0 0.0
      %1141 = vmatprep.subr.mxu0 0.0
      %1142 = vmatpush1.msra.mxu0 %v1038
      %1143 = vmatprep.subr.mxu0 0.0
      %1144 = vmatpush2.msra.mxu0 0.0
      %1145 = vmatprep.subr.mxu0 0.0
      %1146 = vmatpush2.msra.mxu0 0.0
      %1147 = vmatprep.subr.mxu0 0.0
      %1148 = vmatpush2.msra.mxu0 0.0
      %1149 = vmatprep.subr.mxu0 0.0
      %1150 = vmatpush2.msra.mxu0 0.0
      %1151 = vmatprep.subr.mxu0 0.0
      %1152 = vmatpush2.msra.mxu0 0.0
      %1153 = vmatprep.subr.mxu0 0.0
      %1154 = vmatpush2.msra.mxu0 0.0
      %1155 = vmatprep.subr.mxu0 0.0
      %1156 = vmatpush2.msra.mxu0 0.0
      %1157 = vmatprep.subr.mxu0 0.0
      %1158 = vmatpush2.msra.mxu0 0.0
      %1159 = vmatprep.subr.mxu0 0.0
      %1160 = vmatpush2.msra.mxu0 0.0
      %1161 = vmatprep.subr.mxu0 0.0
      %1162 = vmatpush2.msra.mxu0 0.0
      %1163 = vmatprep.subr.mxu0 0.0
      %1164 = vmatpush2.msra.mxu0 0.0
      %1165 = vmatprep.subr.mxu0 0.0
      %1166 = vmatpush2.msra.mxu0 0.0
      %1167 = vmatprep.subr.mxu0 0.0
      %1168 = vmatpush2.msra.mxu0 0.0
      %1169 = vmatprep.subr.mxu0 0.0
      %1170 = vmatpush2.msra.mxu0 0.0
      %1171 = vmatprep.subr.mxu0 0.0
      %1172 = vmatpush2.msra.mxu0 0.0
      %1173 = vmatprep.subr.mxu0 0.0
      %1174 = vmatpush2.msra.mxu0 0.0
      %1175 = vmatprep.mubr.f32.mxu0 0.0
      %1176 = vmatmul.mubr.f32.gmra.mxu0 %v1032
      %v1177 = vpop.f32.mrf.mxu0
      %v1178 = vadd.f32 0.0, %v1177
      %v1179 = vpop.f32.mrf.mxu0
      %1180 = vdwg.mxu0
      %v1181 = vadd.f32 %v1012, %v1107
      %v1182 = vadd.f32 %v1013, %v1109
      %v1183 = vadd.f32 %v1014, %v1178
      %v1184 = vld [vmem:[%s165] sm:$0xff]
      %v1185 = vld [vmem:[%s165 + $0x8] sm:$0xf]
      %s1186 = scalar_lea.vmem %s1, 48
      %v1187 = vld [vmem:[%s1186] sm:$0xff]
      %v1190 = vcombine.high %v1184, %v1184
      %1191 = vrot.lane.b32.xlu0 %v1184, 92
      %v1192 = vpop.permute.xlu0 %1191
      %1193 = vrot.lane.b32.xlu0 %v1190, 92
      %v1194 = vpop.permute.xlu0 %1193
      %1195 = vrot.lane.b32.xlu0 %v1185, 92
      %v1196 = vpop.permute.xlu0 %1195
      %vm1197 = vcmask 752640
      %v1198 = vsel %vm1197, %v1192, %v1194
      %v1199 = vsel %vm1197, %v1194, %v1196
      %v1201 = vsel %vm184, %v1187, 0
      %v1203 = vsel %vm188, %v1198, 0
      %v1205 = vsel %vm188, %v1199, 0
      %v1207 = vsel %vm188, %v1196, 0
      %1209 = vmatprep.subr.mxu0 0.0
      %1210 = vmatpush1.msra.mxu0 0.0
      %1211 = vmatprep.subr.mxu0 0.0
      %1212 = vmatpush1.msra.mxu0 0.0
      %1213 = vmatprep.subr.mxu0 0.0
      %1214 = vmatpush1.msra.mxu0 0.0
      %1215 = vmatprep.subr.mxu0 0.0
      %1216 = vmatpush1.msra.mxu0 0.0
      %1217 = vmatprep.subr.mxu0 0.0
      %1218 = vmatpush1.msra.mxu0 0.0
      %1219 = vmatprep.subr.mxu0 0.0
      %1220 = vmatpush1.msra.mxu0 0.0
      %1221 = vmatprep.subr.mxu0 0.0
      %1222 = vmatpush1.msra.mxu0 0.0
      %1223 = vmatprep.subr.mxu0 0.0
      %1224 = vmatpush1.msra.mxu0 0.0
      %1225 = vmatprep.subr.mxu0 0.0
      %1226 = vmatpush1.msra.mxu0 0.0
      %1227 = vmatprep.subr.mxu0 0.0
      %1228 = vmatpush1.msra.mxu0 0.0
      %1229 = vmatprep.subr.mxu0 0.0
      %1230 = vmatpush1.msra.mxu0 0.0
      %1231 = vmatprep.subr.mxu0 0.0
      %1232 = vmatpush1.msra.mxu0 0.0
      %1233 = vmatprep.subr.mxu0 0.0
      %1234 = vmatpush1.msra.mxu0 0.0
      %1235 = vmatprep.subr.mxu0 0.0
      %1236 = vmatpush1.msra.mxu0 0.0
      %1237 = vmatprep.subr.mxu0 0.0
      %1238 = vmatpush1.msra.mxu0 0.0
      %1239 = vmatprep.subr.mxu0 %v1205
      %1240 = vmatpush1.msra.mxu0 %v1203
      %1241 = vmatprep.subr.mxu0 0.0
      %1242 = vmatpush2.msra.mxu0 0.0
      %1243 = vmatprep.subr.mxu0 0.0
      %1244 = vmatpush2.msra.mxu0 0.0
      %1245 = vmatprep.subr.mxu0 0.0
      %1246 = vmatpush2.msra.mxu0 0.0
      %1247 = vmatprep.subr.mxu0 0.0
      %1248 = vmatpush2.msra.mxu0 0.0
      %1249 = vmatprep.subr.mxu0 0.0
      %1250 = vmatpush2.msra.mxu0 0.0
      %1251 = vmatprep.subr.mxu0 0.0
      %1252 = vmatpush2.msra.mxu0 0.0
      %1253 = vmatprep.subr.mxu0 0.0
      %1254 = vmatpush2.msra.mxu0 0.0
      %1255 = vmatprep.subr.mxu0 0.0
      %1256 = vmatpush2.msra.mxu0 0.0
      %1257 = vmatprep.subr.mxu0 0.0
      %1258 = vmatpush2.msra.mxu0 0.0
      %1259 = vmatprep.subr.mxu0 0.0
      %1260 = vmatpush2.msra.mxu0 0.0
      %1261 = vmatprep.subr.mxu0 0.0
      %1262 = vmatpush2.msra.mxu0 0.0
      %1263 = vmatprep.subr.mxu0 0.0
      %1264 = vmatpush2.msra.mxu0 0.0
      %1265 = vmatprep.subr.mxu0 0.0
      %1266 = vmatpush2.msra.mxu0 0.0
      %1267 = vmatprep.subr.mxu0 0.0
      %1268 = vmatpush2.msra.mxu0 0.0
      %1269 = vmatprep.subr.mxu0 0.0
      %1270 = vmatpush2.msra.mxu0 0.0
      %1271 = vmatprep.subr.mxu0 0.0
      %1272 = vmatpush2.msra.mxu0 0.0
      %1273 = vmatprep.mubr.f32.mxu0 0.0
      %1274 = vmatmul.mubr.f32.gmra.mxu0 %v1201
      %v1275 = vpop.f32.mrf.mxu0
      %v1276 = vadd.f32 0.0, %v1275
      %v1277 = vpop.f32.mrf.mxu0
      %v1278 = vadd.f32 0.0, %v1277
      %1279 = vdwg.mxu0
      %1280 = vmatprep.subr.mxu0 0.0
      %1281 = vmatpush1.msra.mxu0 0.0
      %1282 = vmatprep.subr.mxu0 0.0
      %1283 = vmatpush1.msra.mxu0 0.0
      %1284 = vmatprep.subr.mxu0 0.0
      %1285 = vmatpush1.msra.mxu0 0.0
      %1286 = vmatprep.subr.mxu0 0.0
      %1287 = vmatpush1.msra.mxu0 0.0
      %1288 = vmatprep.subr.mxu0 0.0
      %1289 = vmatpush1.msra.mxu0 0.0
      %1290 = vmatprep.subr.mxu0 0.0
      %1291 = vmatpush1.msra.mxu0 0.0
      %1292 = vmatprep.subr.mxu0 0.0
      %1293 = vmatpush1.msra.mxu0 0.0
      %1294 = vmatprep.subr.mxu0 0.0
      %1295 = vmatpush1.msra.mxu0 0.0
      %1296 = vmatprep.subr.mxu0 0.0
      %1297 = vmatpush1.msra.mxu0 0.0
      %1298 = vmatprep.subr.mxu0 0.0
      %1299 = vmatpush1.msra.mxu0 0.0
      %1300 = vmatprep.subr.mxu0 0.0
      %1301 = vmatpush1.msra.mxu0 0.0
      %1302 = vmatprep.subr.mxu0 0.0
      %1303 = vmatpush1.msra.mxu0 0.0
      %1304 = vmatprep.subr.mxu0 0.0
      %1305 = vmatpush1.msra.mxu0 0.0
      %1306 = vmatprep.subr.mxu0 0.0
      %1307 = vmatpush1.msra.mxu0 0.0
      %1308 = vmatprep.subr.mxu0 0.0
      %1309 = vmatpush1.msra.mxu0 0.0
      %1310 = vmatprep.subr.mxu0 0.0
      %1311 = vmatpush1.msra.mxu0 %v1207
      %1312 = vmatprep.subr.mxu0 0.0
      %1313 = vmatpush2.msra.mxu0 0.0
      %1314 = vmatprep.subr.mxu0 0.0
      %1315 = vmatpush2.msra.mxu0 0.0
      %1316 = vmatprep.subr.mxu0 0.0
      %1317 = vmatpush2.msra.mxu0 0.0
      %1318 = vmatprep.subr.mxu0 0.0
      %1319 = vmatpush2.msra.mxu0 0.0
      %1320 = vmatprep.subr.mxu0 0.0
      %1321 = vmatpush2.msra.mxu0 0.0
      %1322 = vmatprep.subr.mxu0 0.0
      %1323 = vmatpush2.msra.mxu0 0.0
      %1324 = vmatprep.subr.mxu0 0.0
      %1325 = vmatpush2.msra.mxu0 0.0
      %1326 = vmatprep.subr.mxu0 0.0
      %1327 = vmatpush2.msra.mxu0 0.0
      %1328 = vmatprep.subr.mxu0 0.0
      %1329 = vmatpush2.msra.mxu0 0.0
      %1330 = vmatprep.subr.mxu0 0.0
      %1331 = vmatpush2.msra.mxu0 0.0
      %1332 = vmatprep.subr.mxu0 0.0
      %1333 = vmatpush2.msra.mxu0 0.0
      %1334 = vmatprep.subr.mxu0 0.0
      %1335 = vmatpush2.msra.mxu0 0.0
      %1336 = vmatprep.subr.mxu0 0.0
      %1337 = vmatpush2.msra.mxu0 0.0
      %1338 = vmatprep.subr.mxu0 0.0
      %1339 = vmatpush2.msra.mxu0 0.0
      %1340 = vmatprep.subr.mxu0 0.0
      %1341 = vmatpush2.msra.mxu0 0.0
      %1342 = vmatprep.subr.mxu0 0.0
      %1343 = vmatpush2.msra.mxu0 0.0
      %1344 = vmatprep.mubr.f32.mxu0 0.0
      %1345 = vmatmul.mubr.f32.gmra.mxu0 %v1201
      %v1346 = vpop.f32.mrf.mxu0
      %v1347 = vadd.f32 0.0, %v1346
      %v1348 = vpop.f32.mrf.mxu0
      %1349 = vdwg.mxu0
      %v1350 = vadd.f32 %v1181, %v1276
      %v1351 = vadd.f32 %v1182, %v1278
      %v1352 = vadd.f32 %v1183, %v1347
      %v1353 = vld [vmem:[%s165] sm:$0xff]
      %v1354 = vld [vmem:[%s165 + $0x8] sm:$0xf]
      %s1355 = scalar_lea.vmem %s1, 56
      %v1356 = vld [vmem:[%s1355] sm:$0xff]
      %v1359 = vcombine.high %v1353, %v1353
      %1360 = vrot.lane.b32.xlu0 %v1353, 91
      %v1361 = vpop.permute.xlu0 %1360
      %1362 = vrot.lane.b32.xlu0 %v1359, 91
      %v1363 = vpop.permute.xlu0 %1362
      %1364 = vrot.lane.b32.xlu0 %v1354, 91
      %v1365 = vpop.permute.xlu0 %1364
      %vm1366 = vcmask 744448
      %v1367 = vsel %vm1366, %v1361, %v1363
      %v1368 = vsel %vm1366, %v1363, %v1365
      %v1370 = vsel %vm184, %v1356, 0
      %v1372 = vsel %vm188, %v1367, 0
      %v1374 = vsel %vm188, %v1368, 0
      %v1376 = vsel %vm188, %v1365, 0
      %1378 = vmatprep.subr.mxu0 0.0
      %1379 = vmatpush1.msra.mxu0 0.0
      %1380 = vmatprep.subr.mxu0 0.0
      %1381 = vmatpush1.msra.mxu0 0.0
      %1382 = vmatprep.subr.mxu0 0.0
      %1383 = vmatpush1.msra.mxu0 0.0
      %1384 = vmatprep.subr.mxu0 0.0
      %1385 = vmatpush1.msra.mxu0 0.0
      %1386 = vmatprep.subr.mxu0 0.0
      %1387 = vmatpush1.msra.mxu0 0.0
      %1388 = vmatprep.subr.mxu0 0.0
      %1389 = vmatpush1.msra.mxu0 0.0
      %1390 = vmatprep.subr.mxu0 0.0
      %1391 = vmatpush1.msra.mxu0 0.0
      %1392 = vmatprep.subr.mxu0 0.0
      %1393 = vmatpush1.msra.mxu0 0.0
      %1394 = vmatprep.subr.mxu0 0.0
      %1395 = vmatpush1.msra.mxu0 0.0
      %1396 = vmatprep.subr.mxu0 0.0
      %1397 = vmatpush1.msra.mxu0 0.0
      %1398 = vmatprep.subr.mxu0 0.0
      %1399 = vmatpush1.msra.mxu0 0.0
      %1400 = vmatprep.subr.mxu0 0.0
      %1401 = vmatpush1.msra.mxu0 0.0
      %1402 = vmatprep.subr.mxu0 0.0
      %1403 = vmatpush1.msra.mxu0 0.0
      %1404 = vmatprep.subr.mxu0 0.0
      %1405 = vmatpush1.msra.mxu0 0.0
      %1406 = vmatprep.subr.mxu0 0.0
      %1407 = vmatpush1.msra.mxu0 0.0
      %1408 = vmatprep.subr.mxu0 %v1374
      %1409 = vmatpush1.msra.mxu0 %v1372
      %1410 = vmatprep.subr.mxu0 0.0
      %1411 = vmatpush2.msra.mxu0 0.0
      %1412 = vmatprep.subr.mxu0 0.0
      %1413 = vmatpush2.msra.mxu0 0.0
      %1414 = vmatprep.subr.mxu0 0.0
      %1415 = vmatpush2.msra.mxu0 0.0
      %1416 = vmatprep.subr.mxu0 0.0
      %1417 = vmatpush2.msra.mxu0 0.0
      %1418 = vmatprep.subr.mxu0 0.0
      %1419 = vmatpush2.msra.mxu0 0.0
      %1420 = vmatprep.subr.mxu0 0.0
      %1421 = vmatpush2.msra.mxu0 0.0
      %1422 = vmatprep.subr.mxu0 0.0
      %1423 = vmatpush2.msra.mxu0 0.0
      %1424 = vmatprep.subr.mxu0 0.0
      %1425 = vmatpush2.msra.mxu0 0.0
      %1426 = vmatprep.subr.mxu0 0.0
      %1427 = vmatpush2.msra.mxu0 0.0
      %1428 = vmatprep.subr.mxu0 0.0
      %1429 = vmatpush2.msra.mxu0 0.0
      %1430 = vmatprep.subr.mxu0 0.0
      %1431 = vmatpush2.msra.mxu0 0.0
      %1432 = vmatprep.subr.mxu0 0.0
      %1433 = vmatpush2.msra.mxu0 0.0
      %1434 = vmatprep.subr.mxu0 0.0
      %1435 = vmatpush2.msra.mxu0 0.0
      %1436 = vmatprep.subr.mxu0 0.0
      %1437 = vmatpush2.msra.mxu0 0.0
      %1438 = vmatprep.subr.mxu0 0.0
      %1439 = vmatpush2.msra.mxu0 0.0
      %1440 = vmatprep.subr.mxu0 0.0
      %1441 = vmatpush2.msra.mxu0 0.0
      %1442 = vmatprep.mubr.f32.mxu0 0.0
      %1443 = vmatmul.mubr.f32.gmra.mxu0 %v1370
      %v1444 = vpop.f32.mrf.mxu0
      %v1445 = vadd.f32 0.0, %v1444
      %v1446 = vpop.f32.mrf.mxu0
      %v1447 = vadd.f32 0.0, %v1446
      %1448 = vdwg.mxu0
      %1449 = vmatprep.subr.mxu0 0.0
      %1450 = vmatpush1.msra.mxu0 0.0
      %1451 = vmatprep.subr.mxu0 0.0
      %1452 = vmatpush1.msra.mxu0 0.0
      %1453 = vmatprep.subr.mxu0 0.0
      %1454 = vmatpush1.msra.mxu0 0.0
      %1455 = vmatprep.subr.mxu0 0.0
      %1456 = vmatpush1.msra.mxu0 0.0
      %1457 = vmatprep.subr.mxu0 0.0
      %1458 = vmatpush1.msra.mxu0 0.0
      %1459 = vmatprep.subr.mxu0 0.0
      %1460 = vmatpush1.msra.mxu0 0.0
      %1461 = vmatprep.subr.mxu0 0.0
      %1462 = vmatpush1.msra.mxu0 0.0
      %1463 = vmatprep.subr.mxu0 0.0
      %1464 = vmatpush1.msra.mxu0 0.0
      %1465 = vmatprep.subr.mxu0 0.0
      %1466 = vmatpush1.msra.mxu0 0.0
      %1467 = vmatprep.subr.mxu0 0.0
      %1468 = vmatpush1.msra.mxu0 0.0
      %1469 = vmatprep.subr.mxu0 0.0
      %1470 = vmatpush1.msra.mxu0 0.0
      %1471 = vmatprep.subr.mxu0 0.0
      %1472 = vmatpush1.msra.mxu0 0.0
      %1473 = vmatprep.subr.mxu0 0.0
      %1474 = vmatpush1.msra.mxu0 0.0
      %1475 = vmatprep.subr.mxu0 0.0
      %1476 = vmatpush1.msra.mxu0 0.0
      %1477 = vmatprep.subr.mxu0 0.0
      %1478 = vmatpush1.msra.mxu0 0.0
      %1479 = vmatprep.subr.mxu0 0.0
      %1480 = vmatpush1.msra.mxu0 %v1376
      %1481 = vmatprep.subr.mxu0 0.0
      %1482 = vmatpush2.msra.mxu0 0.0
      %1483 = vmatprep.subr.mxu0 0.0
      %1484 = vmatpush2.msra.mxu0 0.0
      %1485 = vmatprep.subr.mxu0 0.0
      %1486 = vmatpush2.msra.mxu0 0.0
      %1487 = vmatprep.subr.mxu0 0.0
      %1488 = vmatpush2.msra.mxu0 0.0
      %1489 = vmatprep.subr.mxu0 0.0
      %1490 = vmatpush2.msra.mxu0 0.0
      %1491 = vmatprep.subr.mxu0 0.0
      %1492 = vmatpush2.msra.mxu0 0.0
      %1493 = vmatprep.subr.mxu0 0.0
      %1494 = vmatpush2.msra.mxu0 0.0
      %1495 = vmatprep.subr.mxu0 0.0
      %1496 = vmatpush2.msra.mxu0 0.0
      %1497 = vmatprep.subr.mxu0 0.0
      %1498 = vmatpush2.msra.mxu0 0.0
      %1499 = vmatprep.subr.mxu0 0.0
      %1500 = vmatpush2.msra.mxu0 0.0
      %1501 = vmatprep.subr.mxu0 0.0
      %1502 = vmatpush2.msra.mxu0 0.0
      %1503 = vmatprep.subr.mxu0 0.0
      %1504 = vmatpush2.msra.mxu0 0.0
      %1505 = vmatprep.subr.mxu0 0.0
      %1506 = vmatpush2.msra.mxu0 0.0
      %1507 = vmatprep.subr.mxu0 0.0
      %1508 = vmatpush2.msra.mxu0 0.0
      %1509 = vmatprep.subr.mxu0 0.0
      %1510 = vmatpush2.msra.mxu0 0.0
      %1511 = vmatprep.subr.mxu0 0.0
      %1512 = vmatpush2.msra.mxu0 0.0
      %1513 = vmatprep.mubr.f32.mxu0 0.0
      %1514 = vmatmul.mubr.f32.gmra.mxu0 %v1370
      %v1515 = vpop.f32.mrf.mxu0
      %v1516 = vadd.f32 0.0, %v1515
      %v1517 = vpop.f32.mrf.mxu0
      %1518 = vdwg.mxu0
      %v1519 = vadd.f32 %v1350, %v1445
      %v1520 = vadd.f32 %v1351, %v1447
      %v1521 = vadd.f32 %v1352, %v1516
      %v1522 = vld [vmem:[%s165] sm:$0xff]
      %v1523 = vld [vmem:[%s165 + $0x8] sm:$0xf]
      %s1524 = scalar_lea.vmem %s1, 64
      %v1525 = vld [vmem:[%s1524] sm:$0xff]
      %v1528 = vcombine.high %v1522, %v1522
      %1529 = vrot.lane.b32.xlu0 %v1522, 90
      %v1530 = vpop.permute.xlu0 %1529
      %1531 = vrot.lane.b32.xlu0 %v1528, 90
      %v1532 = vpop.permute.xlu0 %1531
      %1533 = vrot.lane.b32.xlu0 %v1523, 90
      %v1534 = vpop.permute.xlu0 %1533
      %vm1535 = vcmask 736256
      %v1536 = vsel %vm1535, %v1530, %v1532
      %v1537 = vsel %vm1535, %v1532, %v1534
      %v1539 = vsel %vm184, %v1525, 0
      %v1541 = vsel %vm188, %v1536, 0
      %v1543 = vsel %vm188, %v1537, 0
      %v1545 = vsel %vm188, %v1534, 0
      %1547 = vmatprep.subr.mxu0 0.0
      %1548 = vmatpush1.msra.mxu0 0.0
      %1549 = vmatprep.subr.mxu0 0.0
      %1550 = vmatpush1.msra.mxu0 0.0
      %1551 = vmatprep.subr.mxu0 0.0
      %1552 = vmatpush1.msra.mxu0 0.0
      %1553 = vmatprep.subr.mxu0 0.0
      %1554 = vmatpush1.msra.mxu0 0.0
      %1555 = vmatprep.subr.mxu0 0.0
      %1556 = vmatpush1.msra.mxu0 0.0
      %1557 = vmatprep.subr.mxu0 0.0
      %1558 = vmatpush1.msra.mxu0 0.0
      %1559 = vmatprep.subr.mxu0 0.0
      %1560 = vmatpush1.msra.mxu0 0.0
      %1561 = vmatprep.subr.mxu0 0.0
      %1562 = vmatpush1.msra.mxu0 0.0
      %1563 = vmatprep.subr.mxu0 0.0
      %1564 = vmatpush1.msra.mxu0 0.0
      %1565 = vmatprep.subr.mxu0 0.0
      %1566 = vmatpush1.msra.mxu0 0.0
      %1567 = vmatprep.subr.mxu0 0.0
      %1568 = vmatpush1.msra.mxu0 0.0
      %1569 = vmatprep.subr.mxu0 0.0
      %1570 = vmatpush1.msra.mxu0 0.0
      %1571 = vmatprep.subr.mxu0 0.0
      %1572 = vmatpush1.msra.mxu0 0.0
      %1573 = vmatprep.subr.mxu0 0.0
      %1574 = vmatpush1.msra.mxu0 0.0
      %1575 = vmatprep.subr.mxu0 0.0
      %1576 = vmatpush1.msra.mxu0 0.0
      %1577 = vmatprep.subr.mxu0 %v1543
      %1578 = vmatpush1.msra.mxu0 %v1541
      %1579 = vmatprep.subr.mxu0 0.0
      %1580 = vmatpush2.msra.mxu0 0.0
      %1581 = vmatprep.subr.mxu0 0.0
      %1582 = vmatpush2.msra.mxu0 0.0
      %1583 = vmatprep.subr.mxu0 0.0
      %1584 = vmatpush2.msra.mxu0 0.0
      %1585 = vmatprep.subr.mxu0 0.0
      %1586 = vmatpush2.msra.mxu0 0.0
      %1587 = vmatprep.subr.mxu0 0.0
      %1588 = vmatpush2.msra.mxu0 0.0
      %1589 = vmatprep.subr.mxu0 0.0
      %1590 = vmatpush2.msra.mxu0 0.0
      %1591 = vmatprep.subr.mxu0 0.0
      %1592 = vmatpush2.msra.mxu0 0.0
      %1593 = vmatprep.subr.mxu0 0.0
      %1594 = vmatpush2.msra.mxu0 0.0
      %1595 = vmatprep.subr.mxu0 0.0
      %1596 = vmatpush2.msra.mxu0 0.0
      %1597 = vmatprep.subr.mxu0 0.0
      %1598 = vmatpush2.msra.mxu0 0.0
      %1599 = vmatprep.subr.mxu0 0.0
      %1600 = vmatpush2.msra.mxu0 0.0
      %1601 = vmatprep.subr.mxu0 0.0
      %1602 = vmatpush2.msra.mxu0 0.0
      %1603 = vmatprep.subr.mxu0 0.0
      %1604 = vmatpush2.msra.mxu0 0.0
      %1605 = vmatprep.subr.mxu0 0.0
      %1606 = vmatpush2.msra.mxu0 0.0
      %1607 = vmatprep.subr.mxu0 0.0
      %1608 = vmatpush2.msra.mxu0 0.0
      %1609 = vmatprep.subr.mxu0 0.0
      %1610 = vmatpush2.msra.mxu0 0.0
      %1611 = vmatprep.mubr.f32.mxu0 0.0
      %1612 = vmatmul.mubr.f32.gmra.mxu0 %v1539
      %v1613 = vpop.f32.mrf.mxu0
      %v1614 = vadd.f32 0.0, %v1613
      %v1615 = vpop.f32.mrf.mxu0
      %v1616 = vadd.f32 0.0, %v1615
      %1617 = vdwg.mxu0
      %1618 = vmatprep.subr.mxu0 0.0
      %1619 = vmatpush1.msra.mxu0 0.0
      %1620 = vmatprep.subr.mxu0 0.0
      %1621 = vmatpush1.msra.mxu0 0.0
      %1622 = vmatprep.subr.mxu0 0.0
      %1623 = vmatpush1.msra.mxu0 0.0
      %1624 = vmatprep.subr.mxu0 0.0
      %1625 = vmatpush1.msra.mxu0 0.0
      %1626 = vmatprep.subr.mxu0 0.0
      %1627 = vmatpush1.msra.mxu0 0.0
      %1628 = vmatprep.subr.mxu0 0.0
      %1629 = vmatpush1.msra.mxu0 0.0
      %1630 = vmatprep.subr.mxu0 0.0
      %1631 = vmatpush1.msra.mxu0 0.0
      %1632 = vmatprep.subr.mxu0 0.0
      %1633 = vmatpush1.msra.mxu0 0.0
      %1634 = vmatprep.subr.mxu0 0.0
      %1635 = vmatpush1.msra.mxu0 0.0
      %1636 = vmatprep.subr.mxu0 0.0
      %1637 = vmatpush1.msra.mxu0 0.0
      %1638 = vmatprep.subr.mxu0 0.0
      %1639 = vmatpush1.msra.mxu0 0.0
      %1640 = vmatprep.subr.mxu0 0.0
      %1641 = vmatpush1.msra.mxu0 0.0
      %1642 = vmatprep.subr.mxu0 0.0
      %1643 = vmatpush1.msra.mxu0 0.0
      %1644 = vmatprep.subr.mxu0 0.0
      %1645 = vmatpush1.msra.mxu0 0.0
      %1646 = vmatprep.subr.mxu0 0.0
      %1647 = vmatpush1.msra.mxu0 0.0
      %1648 = vmatprep.subr.mxu0 0.0
      %1649 = vmatpush1.msra.mxu0 %v1545
      %1650 = vmatprep.subr.mxu0 0.0
      %1651 = vmatpush2.msra.mxu0 0.0
      %1652 = vmatprep.subr.mxu0 0.0
      %1653 = vmatpush2.msra.mxu0 0.0
      %1654 = vmatprep.subr.mxu0 0.0
      %1655 = vmatpush2.msra.mxu0 0.0
      %1656 = vmatprep.subr.mxu0 0.0
      %1657 = vmatpush2.msra.mxu0 0.0
      %1658 = vmatprep.subr.mxu0 0.0
      %1659 = vmatpush2.msra.mxu0 0.0
      %1660 = vmatprep.subr.mxu0 0.0
      %1661 = vmatpush2.msra.mxu0 0.0
      %1662 = vmatprep.subr.mxu0 0.0
      %1663 = vmatpush2.msra.mxu0 0.0
      %1664 = vmatprep.subr.mxu0 0.0
      %1665 = vmatpush2.msra.mxu0 0.0
      %1666 = vmatprep.subr.mxu0 0.0
      %1667 = vmatpush2.msra.mxu0 0.0
      %1668 = vmatprep.subr.mxu0 0.0
      %1669 = vmatpush2.msra.mxu0 0.0
      %1670 = vmatprep.subr.mxu0 0.0
      %1671 = vmatpush2.msra.mxu0 0.0
      %1672 = vmatprep.subr.mxu0 0.0
      %1673 = vmatpush2.msra.mxu0 0.0
      %1674 = vmatprep.subr.mxu0 0.0
      %1675 = vmatpush2.msra.mxu0 0.0
      %1676 = vmatprep.subr.mxu0 0.0
      %1677 = vmatpush2.msra.mxu0 0.0
      %1678 = vmatprep.subr.mxu0 0.0
      %1679 = vmatpush2.msra.mxu0 0.0
      %1680 = vmatprep.subr.mxu0 0.0
      %1681 = vmatpush2.msra.mxu0 0.0
      %1682 = vmatprep.mubr.f32.mxu0 0.0
      %1683 = vmatmul.mubr.f32.gmra.mxu0 %v1539
      %v1684 = vpop.f32.mrf.mxu0
      %v1685 = vadd.f32 0.0, %v1684
      %v1686 = vpop.f32.mrf.mxu0
      %1687 = vdwg.mxu0
      %v1688 = vadd.f32 %v1519, %v1614
      %v1689 = vadd.f32 %v1520, %v1616
      %v1690 = vadd.f32 %v1521, %v1685
      %1691 = vst [vmem:[%s170] sm:$0xff] %v1688
      %1692 = vst [vmem:[%s170 + $0x8] sm:$0xff] %v1689
      %vm1693 = vcmask 261120
      %1694 = vst.msk [vmem:[%s170 + $0x10] sm:$0xff] %vm1693, %v1690
      %p1695 = scmp.lt.s32.totalorder %s14, 1
      %s1696 = scalar_select %p1695, %s14, 1
      %s1697 = smul.addr %s1696, 3
      %s1698 = smul.addr %s1697, 8
      %s1699 = scalar_lea.vmem %s3, %s1698
      // Predicated region
      $region33: #{conv_bias_forward.1} parent=31 // pred_check
        %p1700 = pneg %p100
      $region34: #{conv_bias_forward.1} parent=31 // pred_check_branch
        %1702 = sbr.rel (%p1700) target = $region36
      $region35: #{conv_bias_forward.1} parent=31 // pred_region
        _
      $region36: #{conv_bias_forward.1} parent=31 // pred_fallthru
        _
    $region32: #{conv_bias_forward.1} parent=5 // pred_fallthru
      _
    %p1703 = scmp.le.s32.totalorder 2, %s9
    // Predicated region
    $region37: #{conv_bias_forward.1} parent=5 // pred_check
      %p1704 = pneg %p1703
    $region38: #{conv_bias_forward.1} parent=5 // pred_check_branch
      %1706 = sbr.rel (%p1704) target = $region40
    $region39: #{conv_bias_forward.1} parent=5 // pred_region
      %s1707 = ssub.s32 %s9, 2
      // Predicated region
      $region41: #{conv_bias_forward.1} parent=39 // pred_check
        %p1708 = pneg %p106
      $region42: #{conv_bias_forward.1} parent=39 // pred_check_branch
        %1710 = sbr.rel (%p1708) target = $region44
      $region43: #{conv_bias_forward.1} parent=39 // pred_region
        %p1711 = scmp.lt.s32.totalorder %s15, 1
        %s1712 = scalar_select %p1711, %s15, 1
        %s1713 = smul.addr %s1712, 3
        %s1714 = smul.addr %s1713, 8
        %s1715 = scalar_lea.vmem %s3, %s1714
      $region44: #{conv_bias_forward.1} parent=39 // pred_fallthru
        _
    $region40: #{conv_bias_forward.1} parent=5 // pred_fallthru
      _
  $region6: #{conv_bias_forward.1} parent=0 // loop_footer
    %s13 = sadd.s32 1, %s9
  $region7: #{conv_bias_forward.1} parent=0 // loop_footer_branch
    %8 = sbr.rel target = $region3
  $region8: #{conv_bias_forward.1} parent=0 // loop_exit
    _

</llo_original>
